<compile_context>
chip_gen: v7x
topology: tpu7x:2x2x1
jax: 0.10.0
libtpu: 0.0.40
codegen_flags: <defaults>
</compile_context>

<pallas_src>
import math

import jax
import jax.numpy as jnp
from jax.experimental import pallas as pl
from jax.experimental.pallas import tpu as pltpu


def _round_up(x, m):
    return -(-x // m) * m


# ----------------------------------------------------------------------------
# Kernel 1: batched input projection (non-recurrent, parallel over row blocks).
# ----------------------------------------------------------------------------
def input_projection_kernel(x_ref, wih_ref, bias_ref, xg_ref):
    # x_ref: (RB, E) f32 ; wih_ref: (E, 4*HP) bf16 ; bias_ref: (1, 4*HP) f32
    xg_ref[...] = (
        jnp.dot(x_ref[...].astype(jnp.bfloat16), wih_ref[...],
                preferred_element_type=jnp.float32)
        + bias_ref[...])


# ----------------------------------------------------------------------------
# Kernel 2: LSTM recurrence over a chunk of timesteps + fused head.
# ----------------------------------------------------------------------------
def lstm_recurrence_kernel(xg_ref, whh_ref, wtag_ref, btag_ref, pred_ref,
                           h_scr, c_scr):
    chunk = pl.program_id(0)

    @pl.when(chunk == 0)
    def _init():
        h_scr[...] = jnp.zeros_like(h_scr)
        c_scr[...] = jnp.zeros_like(c_scr)

    t_chunk = xg_ref.shape[0]
    b, hp = h_scr.shape

    # Loop-invariant values hoisted out of the unrolled time loop
    # (JAX does not CSE broadcast_in_dim; do it once here).
    wtag_b = jnp.broadcast_to(wtag_ref[...], (b, hp))          # (B, HP) f32
    btag = btag_ref[...]                                       # (1, 1) f32
    lane_t = jax.lax.broadcasted_iota(jnp.int32, (b, t_chunk), 1)

    def step(t, carry):
        h, c, pred_acc = carry
        # Precomputed input projection (+bias) + recurrent projection (MXU).
        gates = xg_ref[t] + jnp.dot(h.astype(jnp.bfloat16), whh_ref[...],
                                    preferred_element_type=jnp.float32)
        # Gate order i, f, g, o; each slice is a full 128-lane-aligned tile.
        i_g = jax.nn.sigmoid(gates[:, 0 * hp:1 * hp])
        f_g = jax.nn.sigmoid(gates[:, 1 * hp:2 * hp])
        g_g = jnp.tanh(gates[:, 2 * hp:3 * hp])
        o_g = jax.nn.sigmoid(gates[:, 3 * hp:4 * hp])
        c_new = f_g * c + i_g * g_g
        h_new = o_g * jnp.tanh(c_new)
        # Fused hidden2tag head on VPU/XLU/EUP: ReLU -> dot-with-row -> Sigmoid.
        logit = jnp.sum(jax.nn.relu(h_new) * wtag_b, axis=-1,
                        keepdims=True) + btag                  # (B, 1)
        p = jax.nn.sigmoid(logit)
        pred_acc = jnp.where(lane_t == t, p, pred_acc)         # select into lane t
        return h_new, c_new, pred_acc

    h0 = h_scr[...]
    c0 = c_scr[...]
    pred0 = jnp.zeros((b, t_chunk), jnp.float32)
    unroll = 8 if (t_chunk % 8 == 0) else True
    h_f, c_f, pred_f = jax.lax.fori_loop(0, t_chunk, step, (h0, c0, pred0),
                                         unroll=unroll)
    h_scr[...] = h_f
    c_scr[...] = c_f
    pred_ref[...] = pred_f                                     # one store / chunk


# ----------------------------------------------------------------------------
# Wrapper: two pallas_calls + glue.
# ----------------------------------------------------------------------------
@jax.jit
def lstm_predict_padded(x, wih_p, whh_p, bias_p, wtag_p, btag_p):
    """x: (B, T, E) batch_first. Returns sigmoid predictions (B, T)."""
    B, T, E = x.shape
    HP = whh_p.shape[0]
    GP = 4 * HP

    T_CHUNK = T if T <= 128 else 128
    T_pad = _round_up(T, T_CHUNK)
    num_chunks = T_pad // T_CHUNK

    x_tm = jnp.transpose(x, (1, 0, 2)).astype(jnp.float32)      # (T, B, E)
    if T_pad != T:
        x_tm = jnp.pad(x_tm, ((0, T_pad - T), (0, 0), (0, 0)))
    x_flat = x_tm.reshape(T_pad * B, E)                         # row = t*B + b

    RB = T_CHUNK * B
    # Phase 1: input projection for all timesteps (one large, parallel matmul).
    xg_flat = pl.pallas_call(
        input_projection_kernel,
        out_shape=jax.ShapeDtypeStruct((T_pad * B, GP), jnp.float32),
        grid_spec=pltpu.PrefetchScalarGridSpec(
            num_scalar_prefetch=0,
            grid=(num_chunks,),
            in_specs=[
                pl.BlockSpec((RB, E), lambda c: (c, 0)),
                pl.BlockSpec((E, GP), lambda c: (0, 0)),
                pl.BlockSpec((1, GP), lambda c: (0, 0)),
            ],
            out_specs=pl.BlockSpec((RB, GP), lambda c: (c, 0)),
        ),
        compiler_params=pltpu.CompilerParams(
            dimension_semantics=("parallel",)),
    )(x_flat, wih_p, bias_p)

    xg = xg_flat.reshape(T_pad, B, GP)                          # (T, B, 4*HP)

    # Phase 2: sequential recurrence over time chunks.
    preds = pl.pallas_call(
        lstm_recurrence_kernel,
        out_shape=jax.ShapeDtypeStruct((B, T_pad), jnp.float32),
        grid_spec=pltpu.PrefetchScalarGridSpec(
            num_scalar_prefetch=0,
            grid=(num_chunks,),
            in_specs=[
                pl.BlockSpec((T_CHUNK, B, GP), lambda c: (c, 0, 0)),  # xg chunk
                pl.BlockSpec((HP, GP), lambda c: (0, 0)),             # W_hh^T
                pl.BlockSpec((1, HP), lambda c: (0, 0)),              # w_tag row
                pl.BlockSpec((1, 1), lambda c: (0, 0)),               # b_tag
            ],
            out_specs=pl.BlockSpec((B, T_CHUNK), lambda c: (0, c)),
            scratch_shapes=[
                pltpu.VMEM((B, HP), jnp.float32),                     # h carry
                pltpu.VMEM((B, HP), jnp.float32),                     # c carry
            ],
        ),
        compiler_params=pltpu.CompilerParams(
            dimension_semantics=("arbitrary",)),                      # time recurrence
    )(xg, whh_p, wtag_p, btag_p)

    return preds[:, :T]


def my_lstm_forward(x, x_lens, packed):
    """Mirrors MyLSTM.forward. x: (B, T, E); x_lens: python ints."""
    preds_bt = lstm_predict_padded(
        x, packed["wih_p"], packed["whh_p"], packed["bias_p"],
        packed["wtag_p"], packed["btag_p"])                     # (B, T)
    # torch.cat([matrix[:x_len] ...]) — variable-length gather as JAX glue.
    return jnp.concatenate(
        [preds_bt[i, :int(l)] for i, l in enumerate(x_lens)], axis=0)


# ----------------------------------------------------------------------------
# Parameter construction / packing (PyTorch layout -> padded kernel layout).
# ----------------------------------------------------------------------------
def init_raw_params(key, embedding_dim, hidden_dim):
    """Deterministic init matching PyTorch parameter shapes (uniform +-1/sqrt(H))."""
    k = 1.0 / math.sqrt(hidden_dim)
    keys = jax.random.split(key, 6)
    H4 = 4 * hidden_dim
    return {
        "w_ih": jax.random.uniform(keys[0], (H4, embedding_dim), jnp.float32, -k, k),
        "w_hh": jax.random.uniform(keys[1], (H4, hidden_dim), jnp.float32, -k, k),
        "b_ih": jax.random.uniform(keys[2], (H4,), jnp.float32, -k, k),
        "b_hh": jax.random.uniform(keys[3], (H4,), jnp.float32, -k, k),
        "w_tag": jax.random.uniform(keys[4], (1, hidden_dim), jnp.float32, -k, k),
        "b_tag": jax.random.uniform(keys[5], (1,), jnp.float32, -k, k),
    }


def pack_params(raw, hidden_dim):
    """Pad each gate to a 128-lane multiple; bf16 matmul weights, f32 elsewhere.

    Padded columns/rows are zero, so padded lanes of h/c stay exactly 0 and the
    padded lanes never contribute to the head (w_tag padding is zero too).
    """
    H = hidden_dim
    HP = _round_up(H, 128)
    E = raw["w_ih"].shape[1]
    bias = raw["b_ih"] + raw["b_hh"]

    wih_p = jnp.zeros((E, 4 * HP), jnp.float32)
    whh_p = jnp.zeros((HP, 4 * HP), jnp.float32)
    bias_p = jnp.zeros((1, 4 * HP), jnp.float32)
    for g in range(4):
        wih_p = wih_p.at[:, g * HP:g * HP + H].set(raw["w_ih"][g * H:(g + 1) * H, :].T)
        whh_p = whh_p.at[:H, g * HP:g * HP + H].set(raw["w_hh"][g * H:(g + 1) * H, :].T)
        bias_p = bias_p.at[:, g * HP:g * HP + H].set(bias[g * H:(g + 1) * H])

    wtag_p = jnp.zeros((1, HP), jnp.float32).at[:, :H].set(raw["w_tag"])
    btag_p = raw["b_tag"].reshape(1, 1).astype(jnp.float32)

    return {
        "wih_p": wih_p.astype(jnp.bfloat16),   # (E, 4*HP)
        "whh_p": whh_p.astype(jnp.bfloat16),   # (HP, 4*HP)
        "bias_p": bias_p,                      # (1, 4*HP) f32
        "wtag_p": wtag_p,                      # (1, HP)  f32
        "btag_p": btag_p,                      # (1, 1)   f32
    }


# ----------------------------------------------------------------------------
# Pure-JAX reference (mirrors the PyTorch module) for a correctness check.
# ----------------------------------------------------------------------------
def reference_forward(x, x_lens, raw):
    B, T, E = x.shape
    H = raw["w_hh"].shape[1]
    w_ih, w_hh = raw["w_ih"], raw["w_hh"]
    b = raw["b_ih"] + raw["b_hh"]

    def step(carry, x_t):
        h, c = carry
        gates = x_t @ w_ih.T + h @ w_hh.T + b
        i = jax.nn.sigmoid(gates[:, :H])
        f = jax.nn.sigmoid(gates[:, H:2 * H])
        g = jnp.tanh(gates[:, 2 * H:3 * H])
        o = jax.nn.sigmoid(gates[:, 3 * H:])
        c = f * c + i * g
        h = o * jnp.tanh(c)
        return (h, c), h

    (_, _), hs = jax.lax.scan(step,
                              (jnp.zeros((B, H), jnp.float32),
                               jnp.zeros((B, H), jnp.float32)),
                              jnp.transpose(x, (1, 0, 2)))
    hs = jnp.transpose(hs, (1, 0, 2))                            # (B, T, H)
    logits = jax.nn.relu(hs) @ raw["w_tag"].T + raw["b_tag"]     # (B, T, 1)
    probs = jax.nn.sigmoid(logits)[..., 0]
    return jnp.concatenate([probs[i, :int(l)] for i, l in enumerate(x_lens)], 0)


if __name__ == "__main__":
    B, T, E, H = 2, 8, 16, 32
    key = jax.random.PRNGKey(0)
    k_x, k_p = jax.random.split(key)

    x = jax.random.normal(k_x, (B, T, E), dtype=jnp.float32)
    x_lens = [5, 8]

    raw = init_raw_params(k_p, E, H)
    packed = pack_params(raw, H)

    out = my_lstm_forward(x, x_lens, packed)
    out = jax.block_until_ready(out)

    assert out.shape == (sum(x_lens),)
    assert bool(jnp.all((out > 0.0) & (out < 1.0)))

    ref = reference_forward(x, x_lens, raw)
    max_err = float(jnp.max(jnp.abs(out - ref)))
    assert max_err < 2e-2, f"mismatch vs reference: {max_err}"

    print("KERNEL_OK")
</pallas_src>

<mosaic_0001>
module attributes {stable_mosaic.version = 11 : i64} {
  func.func @input_projection_kernel(%arg0: i32, %arg1: memref<16x16xf32, #tpu.memory_space<vmem>>, %arg2: memref<16x512xbf16, #tpu.memory_space<vmem>>, %arg3: memref<1x512xf32, #tpu.memory_space<vmem>>, %arg4: memref<16x512xf32, #tpu.memory_space<vmem>>) attributes {dimension_semantics = [#tpu.dimension_semantics<parallel>], iteration_bounds = array<i64: 1>, scalar_prefetch = 0 : i64, scratch_operands = 0 : i64, tpu.core_type = #tpu.core_type<tc>, window_params = [{transform_indices = @transform_0, window_bounds = array<i64: 16, 16>}, {pipeline_mode = #tpu.pipeline_mode<synchronous>, transform_indices = @transform_1, window_bounds = array<i64: 16, 512>}, {pipeline_mode = #tpu.pipeline_mode<synchronous>, transform_indices = @transform_2, window_bounds = array<i64: 1, 512>}, {transform_indices = @transform_3, window_bounds = array<i64: 16, 512>}]} {
    %c0 = arith.constant 0 : index
    %c0_0 = arith.constant 0 : index
    %0 = vector.load %arg1[%c0, %c0_0] : memref<16x16xf32, #tpu.memory_space<vmem>>, vector<16x16xf32>
    %1 = arith.truncf %0 : vector<16x16xf32> to vector<16x16xbf16>
    %c0_1 = arith.constant 0 : index
    %c0_2 = arith.constant 0 : index
    %2 = vector.load %arg2[%c0_1, %c0_2] : memref<16x512xbf16, #tpu.memory_space<vmem>>, vector<16x512xbf16>
    %cst = arith.constant dense<0.000000e+00> : vector<16x512xf32>
    %3 = tpu.matmul %1, %2, %cst {dimension_numbers = #tpu.dot_dimension_numbers<[1], [0], [0], [1], [0, 0, 1, 1], [], []>} : vector<16x16xbf16>, vector<16x512xbf16>, vector<16x512xf32> -> vector<16x512xf32>
    %c0_3 = arith.constant 0 : index
    %c0_4 = arith.constant 0 : index
    %4 = vector.load %arg3[%c0_3, %c0_4] : memref<1x512xf32, #tpu.memory_space<vmem>>, vector<1x512xf32>
    %5 = vector.broadcast %4 : vector<1x512xf32> to vector<16x512xf32>
    %6 = arith.addf %3, %5 : vector<16x512xf32>
    %c0_5 = arith.constant 0 : index
    %c0_6 = arith.constant 0 : index
    %7 = vector.load %arg4[%c0_5, %c0_6] : memref<16x512xf32, #tpu.memory_space<vmem>>, vector<16x512xf32>
    tpu.vector_store %arg4[%c0_5, %c0_6], %6 {strides = array<i32>} : memref<16x512xf32, #tpu.memory_space<vmem>>, vector<16x512xf32>,
    return
  }
  func.func @transform_0(%arg0: i32) -> (i32, i32) {
    %c0_i32 = arith.constant 0 : i32
    %c0_i32_0 = arith.constant 0 : i32
    return %arg0, %c0_i32 : i32, i32
  }
  func.func @transform_1(%arg0: i32) -> (i32, i32) {
    %c0_i32 = arith.constant 0 : i32
    %c0_i32_0 = arith.constant 0 : i32
    %c0_i32_1 = arith.constant 0 : i32
    return %c0_i32, %c0_i32_0 : i32, i32
  }
  func.func @transform_2(%arg0: i32) -> (i32, i32) {
    %c0_i32 = arith.constant 0 : i32
    %c0_i32_0 = arith.constant 0 : i32
    %c0_i32_1 = arith.constant 0 : i32
    return %c0_i32, %c0_i32_0 : i32, i32
  }
  func.func @transform_3(%arg0: i32) -> (i32, i32) {
    %c0_i32 = arith.constant 0 : i32
    %c0_i32_0 = arith.constant 0 : i32
    return %arg0, %c0_i32 : i32, i32
  }
}

module attributes {stable_mosaic.version = 11 : i64} {
  func.func @lstm_recurrence_kernel(%arg0: i32, %arg1: memref<8x2x512xf32, #tpu.memory_space<vmem>>, %arg2: memref<128x512xbf16, #tpu.memory_space<vmem>>, %arg3: memref<1x128xf32, #tpu.memory_space<vmem>>, %arg4: memref<1x1xf32, #tpu.memory_space<vmem>>, %arg5: memref<2x8xf32, #tpu.memory_space<vmem>>, %arg6: memref<2x128xf32, #tpu.memory_space<vmem>>, %arg7: memref<2x128xf32, #tpu.memory_space<vmem>>) attributes {dimension_semantics = [#tpu.dimension_semantics<arbitrary>], iteration_bounds = array<i64: 1>, scalar_prefetch = 0 : i64, scratch_operands = 2 : i64, tpu.core_type = #tpu.core_type<tc>, window_params = [{transform_indices = @transform_0, window_bounds = array<i64: 8, 2, 512>}, {pipeline_mode = #tpu.pipeline_mode<synchronous>, transform_indices = @transform_1, window_bounds = array<i64: 128, 512>}, {pipeline_mode = #tpu.pipeline_mode<synchronous>, transform_indices = @transform_2, window_bounds = array<i64: 1, 128>}, {pipeline_mode = #tpu.pipeline_mode<synchronous>, transform_indices = @transform_3, window_bounds = array<i64: 1, 1>}, {transform_indices = @transform_4, window_bounds = array<i64: 2, 8>}]} {
    %c0_i32 = arith.constant 0 : i32
    %0 = arith.cmpi eq, %arg0, %c0_i32 : i32
    %1 = arith.extui %0 : i1 to i32
    %c0_i32_0 = arith.constant 0 : i32
    %2 = arith.cmpi ne, %1, %c0_i32_0 : i32
    scf.if %2 {
      %cst_103 = arith.constant 0.000000e+00 : f32
      %406 = vector.broadcast %cst_103 : f32 to vector<2x128xf32>
      %c0_104 = arith.constant 0 : index
      %c0_105 = arith.constant 0 : index
      %407 = vector.load %arg6[%c0_104, %c0_105] : memref<2x128xf32, #tpu.memory_space<vmem>>, vector<2x128xf32>
      tpu.vector_store %arg6[%c0_104, %c0_105], %406 {strides = array<i32>} : memref<2x128xf32, #tpu.memory_space<vmem>>, vector<2x128xf32>,
      %cst_106 = arith.constant 0.000000e+00 : f32
      %408 = vector.broadcast %cst_106 : f32 to vector<2x128xf32>
      %c0_107 = arith.constant 0 : index
      %c0_108 = arith.constant 0 : index
      %409 = vector.load %arg7[%c0_107, %c0_108] : memref<2x128xf32, #tpu.memory_space<vmem>>, vector<2x128xf32>
      tpu.vector_store %arg7[%c0_107, %c0_108], %408 {strides = array<i32>} : memref<2x128xf32, #tpu.memory_space<vmem>>, vector<2x128xf32>,
    } else {
    }
    %c0 = arith.constant 0 : index
    %c0_1 = arith.constant 0 : index
    %3 = vector.load %arg3[%c0, %c0_1] : memref<1x128xf32, #tpu.memory_space<vmem>>, vector<1x128xf32>
    %4 = vector.shape_cast %3 : vector<1x128xf32> to vector<1x128xf32>
    %5 = vector.broadcast %4 : vector<1x128xf32> to vector<2x128xf32>
    %c0_2 = arith.constant 0 : index
    %c0_3 = arith.constant 0 : index
    %6 = vector.load %arg4[%c0_2, %c0_3] : memref<1x1xf32, #tpu.memory_space<vmem>>, vector<1x1xf32>
    %7 = tpu.iota {dimensions = array<i32: 1>} : vector<2x8xi32>
    %c0_4 = arith.constant 0 : index
    %c0_5 = arith.constant 0 : index
    %8 = vector.load %arg6[%c0_4, %c0_5] : memref<2x128xf32, #tpu.memory_space<vmem>>, vector<2x128xf32>
    %c0_6 = arith.constant 0 : index
    %c0_7 = arith.constant 0 : index
    %9 = vector.load %arg7[%c0_6, %c0_7] : memref<2x128xf32, #tpu.memory_space<vmem>>, vector<2x128xf32>
    %cst = arith.constant 0.000000e+00 : f32
    %10 = vector.broadcast %cst : f32 to vector<2x8xf32>
    %c0_i32_8 = arith.constant 0 : i32
    %11 = arith.index_cast %c0_i32_8 : i32 to index
    %c0_9 = arith.constant 0 : index
    %c0_10 = arith.constant 0 : index
    %12 = vector.load %arg1[%11, %c0_9, %c0_10] : memref<8x2x512xf32, #tpu.memory_space<vmem>>, vector<1x2x512xf32>
    %13 = vector.shape_cast %12 : vector<1x2x512xf32> to vector<2x512xf32>
    %14 = arith.truncf %8 : vector<2x128xf32> to vector<2x128xbf16>
    %c0_11 = arith.constant 0 : index
    %c0_12 = arith.constant 0 : index
    %15 = vector.load %arg2[%c0_11, %c0_12] : memref<128x512xbf16, #tpu.memory_space<vmem>>, vector<128x512xbf16>
    %cst_13 = arith.constant dense<0.000000e+00> : vector<2x512xf32>
    %16 = tpu.matmul %14, %15, %cst_13 {dimension_numbers = #tpu.dot_dimension_numbers<[1], [0], [0], [1], [0, 0, 1, 1], [], []>} : vector<2x128xbf16>, vector<128x512xbf16>, vector<2x512xf32> -> vector<2x512xf32>
    %17 = arith.addf %13, %16 : vector<2x512xf32>
    %18 = vector.extract_strided_slice %17 {offsets = [0, 0], sizes = [2, 128], strides = [1, 1]} : vector<2x512xf32> to vector<2x128xf32>
    %19 = arith.negf %18 : vector<2x128xf32>
    %20 = math.exp %19 : vector<2x128xf32>
    %cst_14 = arith.constant 1.000000e+00 : f32
    %21 = vector.broadcast %cst_14 : f32 to vector<2x128xf32>
    %22 = arith.addf %21, %20 : vector<2x128xf32>
    %23 = arith.divf %21, %22 : vector<2x128xf32>
    %24 = vector.extract_strided_slice %17 {offsets = [0, 128], sizes = [2, 128], strides = [1, 1]} : vector<2x512xf32> to vector<2x128xf32>
    %25 = arith.negf %24 : vector<2x128xf32>
    %26 = math.exp %25 : vector<2x128xf32>
    %cst_15 = arith.constant 1.000000e+00 : f32
    %27 = vector.broadcast %cst_15 : f32 to vector<2x128xf32>
    %28 = arith.addf %27, %26 : vector<2x128xf32>
    %29 = arith.divf %27, %28 : vector<2x128xf32>
    %30 = vector.extract_strided_slice %17 {offsets = [0, 256], sizes = [2, 128], strides = [1, 1]} : vector<2x512xf32> to vector<2x128xf32>
    %31 = math.tanh %30 : vector<2x128xf32>
    %32 = vector.extract_strided_slice %17 {offsets = [0, 384], sizes = [2, 128], strides = [1, 1]} : vector<2x512xf32> to vector<2x128xf32>
    %33 = arith.negf %32 : vector<2x128xf32>
    %34 = math.exp %33 : vector<2x128xf32>
    %cst_16 = arith.constant 1.000000e+00 : f32
    %35 = vector.broadcast %cst_16 : f32 to vector<2x128xf32>
    %36 = arith.addf %35, %34 : vector<2x128xf32>
    %37 = arith.divf %35, %36 : vector<2x128xf32>
    %38 = arith.mulf %29, %9 : vector<2x128xf32>
    %39 = arith.mulf %23, %31 : vector<2x128xf32>
    %40 = arith.addf %38, %39 : vector<2x128xf32>
    %41 = math.tanh %40 : vector<2x128xf32>
    %42 = arith.mulf %37, %41 : vector<2x128xf32>
    %cst_17 = arith.constant 0.000000e+00 : f32
    %43 = vector.broadcast %cst_17 : f32 to vector<2x128xf32>
    %44 = arith.maximumf %42, %43 : vector<2x128xf32>
    %45 = arith.mulf %44, %5 : vector<2x128xf32>
    %cst_18 = arith.constant dense<0.000000e+00> : vector<2xf32>
    %46 = vector.multi_reduction <add>, %45, %cst_18 [1] : vector<2x128xf32> to vector<2xf32>
    %47 = vector.shape_cast %46 : vector<2xf32> to vector<2x1xf32>
    %48 = vector.broadcast %6 : vector<1x1xf32> to vector<2x1xf32>
    %49 = arith.addf %47, %48 : vector<2x1xf32>
    %50 = arith.negf %49 : vector<2x1xf32>
    %51 = math.exp %50 : vector<2x1xf32>
    %cst_19 = arith.constant 1.000000e+00 : f32
    %52 = vector.broadcast %cst_19 : f32 to vector<2x1xf32>
    %53 = arith.addf %52, %51 : vector<2x1xf32>
    %54 = arith.divf %52, %53 : vector<2x1xf32>
    %55 = vector.broadcast %c0_i32_8 : i32 to vector<2x8xi32>
    %56 = arith.cmpi eq, %7, %55 : vector<2x8xi32>
    %57 = vector.shape_cast %54 : vector<2x1xf32> to vector<2x1xf32>
    %58 = vector.broadcast %57 : vector<2x1xf32> to vector<2x8xf32>
    %59 = arith.select %56, %58, %10 : vector<2x8xi1>, vector<2x8xf32>
    %c1_i32 = arith.constant 1 : i32
    %60 = arith.index_cast %c1_i32 : i32 to index
    %c0_20 = arith.constant 0 : index
    %c0_21 = arith.constant 0 : index
    %61 = vector.load %arg1[%60, %c0_20, %c0_21] : memref<8x2x512xf32, #tpu.memory_space<vmem>>, vector<1x2x512xf32>
    %62 = vector.shape_cast %61 : vector<1x2x512xf32> to vector<2x512xf32>
    %63 = arith.truncf %42 : vector<2x128xf32> to vector<2x128xbf16>
    %c0_22 = arith.constant 0 : index
    %c0_23 = arith.constant 0 : index
    %64 = vector.load %arg2[%c0_22, %c0_23] : memref<128x512xbf16, #tpu.memory_space<vmem>>, vector<128x512xbf16>
    %cst_24 = arith.constant dense<0.000000e+00> : vector<2x512xf32>
    %65 = tpu.matmul %63, %64, %cst_24 {dimension_numbers = #tpu.dot_dimension_numbers<[1], [0], [0], [1], [0, 0, 1, 1], [], []>} : vector<2x128xbf16>, vector<128x512xbf16>, vector<2x512xf32> -> vector<2x512xf32>
    %66 = arith.addf %62, %65 : vector<2x512xf32>
    %67 = vector.extract_strided_slice %66 {offsets = [0, 0], sizes = [2, 128], strides = [1, 1]} : vector<2x512xf32> to vector<2x128xf32>
    %68 = arith.negf %67 : vector<2x128xf32>
    %69 = math.exp %68 : vector<2x128xf32>
    %cst_25 = arith.constant 1.000000e+00 : f32
    %70 = vector.broadcast %cst_25 : f32 to vector<2x128xf32>
    %71 = arith.addf %70, %69 : vector<2x128xf32>
    %72 = arith.divf %70, %71 : vector<2x128xf32>
    %73 = vector.extract_strided_slice %66 {offsets = [0, 128], sizes = [2, 128], strides = [1, 1]} : vector<2x512xf32> to vector<2x128xf32>
    %74 = arith.negf %73 : vector<2x128xf32>
    %75 = math.exp %74 : vector<2x128xf32>
    %cst_26 = arith.constant 1.000000e+00 : f32
    %76 = vector.broadcast %cst_26 : f32 to vector<2x128xf32>
    %77 = arith.addf %76, %75 : vector<2x128xf32>
    %78 = arith.divf %76, %77 : vector<2x128xf32>
    %79 = vector.extract_strided_slice %66 {offsets = [0, 256], sizes = [2, 128], strides = [1, 1]} : vector<2x512xf32> to vector<2x128xf32>
    %80 = math.tanh %79 : vector<2x128xf32>
    %81 = vector.extract_strided_slice %66 {offsets = [0, 384], sizes = [2, 128], strides = [1, 1]} : vector<2x512xf32> to vector<2x128xf32>
    %82 = arith.negf %81 : vector<2x128xf32>
    %83 = math.exp %82 : vector<2x128xf32>
    %cst_27 = arith.constant 1.000000e+00 : f32
    %84 = vector.broadcast %cst_27 : f32 to vector<2x128xf32>
    %85 = arith.addf %84, %83 : vector<2x128xf32>
    %86 = arith.divf %84, %85 : vector<2x128xf32>
    %87 = arith.mulf %78, %40 : vector<2x128xf32>
    %88 = arith.mulf %72, %80 : vector<2x128xf32>
    %89 = arith.addf %87, %88 : vector<2x128xf32>
    %90 = math.tanh %89 : vector<2x128xf32>
    %91 = arith.mulf %86, %90 : vector<2x128xf32>
    %cst_28 = arith.constant 0.000000e+00 : f32
    %92 = vector.broadcast %cst_28 : f32 to vector<2x128xf32>
    %93 = arith.maximumf %91, %92 : vector<2x128xf32>
    %94 = arith.mulf %93, %5 : vector<2x128xf32>
    %cst_29 = arith.constant dense<0.000000e+00> : vector<2xf32>
    %95 = vector.multi_reduction <add>, %94, %cst_29 [1] : vector<2x128xf32> to vector<2xf32>
    %96 = vector.shape_cast %95 : vector<2xf32> to vector<2x1xf32>
    %97 = vector.broadcast %6 : vector<1x1xf32> to vector<2x1xf32>
    %98 = arith.addf %96, %97 : vector<2x1xf32>
    %99 = arith.negf %98 : vector<2x1xf32>
    %100 = math.exp %99 : vector<2x1xf32>
    %cst_30 = arith.constant 1.000000e+00 : f32
    %101 = vector.broadcast %cst_30 : f32 to vector<2x1xf32>
    %102 = arith.addf %101, %100 : vector<2x1xf32>
    %103 = arith.divf %101, %102 : vector<2x1xf32>
    %104 = vector.broadcast %c1_i32 : i32 to vector<2x8xi32>
    %105 = arith.cmpi eq, %7, %104 : vector<2x8xi32>
    %106 = vector.shape_cast %103 : vector<2x1xf32> to vector<2x1xf32>
    %107 = vector.broadcast %106 : vector<2x1xf32> to vector<2x8xf32>
    %108 = arith.select %105, %107, %59 : vector<2x8xi1>, vector<2x8xf32>
    %c2_i32 = arith.constant 2 : i32
    %109 = arith.index_cast %c2_i32 : i32 to index
    %c0_31 = arith.constant 0 : index
    %c0_32 = arith.constant 0 : index
    %110 = vector.load %arg1[%109, %c0_31, %c0_32] : memref<8x2x512xf32, #tpu.memory_space<vmem>>, vector<1x2x512xf32>
    %111 = vector.shape_cast %110 : vector<1x2x512xf32> to vector<2x512xf32>
    %112 = arith.truncf %91 : vector<2x128xf32> to vector<2x128xbf16>
    %c0_33 = arith.constant 0 : index
    %c0_34 = arith.constant 0 : index
    %113 = vector.load %arg2[%c0_33, %c0_34] : memref<128x512xbf16, #tpu.memory_space<vmem>>, vector<128x512xbf16>
    %cst_35 = arith.constant dense<0.000000e+00> : vector<2x512xf32>
    %114 = tpu.matmul %112, %113, %cst_35 {dimension_numbers = #tpu.dot_dimension_numbers<[1], [0], [0], [1], [0, 0, 1, 1], [], []>} : vector<2x128xbf16>, vector<128x512xbf16>, vector<2x512xf32> -> vector<2x512xf32>
    %115 = arith.addf %111, %114 : vector<2x512xf32>
    %116 = vector.extract_strided_slice %115 {offsets = [0, 0], sizes = [2, 128], strides = [1, 1]} : vector<2x512xf32> to vector<2x128xf32>
    %117 = arith.negf %116 : vector<2x128xf32>
    %118 = math.exp %117 : vector<2x128xf32>
    %cst_36 = arith.constant 1.000000e+00 : f32
    %119 = vector.broadcast %cst_36 : f32 to vector<2x128xf32>
    %120 = arith.addf %119, %118 : vector<2x128xf32>
    %121 = arith.divf %119, %120 : vector<2x128xf32>
    %122 = vector.extract_strided_slice %115 {offsets = [0, 128], sizes = [2, 128], strides = [1, 1]} : vector<2x512xf32> to vector<2x128xf32>
    %123 = arith.negf %122 : vector<2x128xf32>
    %124 = math.exp %123 : vector<2x128xf32>
    %cst_37 = arith.constant 1.000000e+00 : f32
    %125 = vector.broadcast %cst_37 : f32 to vector<2x128xf32>
    %126 = arith.addf %125, %124 : vector<2x128xf32>
    %127 = arith.divf %125, %126 : vector<2x128xf32>
    %128 = vector.extract_strided_slice %115 {offsets = [0, 256], sizes = [2, 128], strides = [1, 1]} : vector<2x512xf32> to vector<2x128xf32>
    %129 = math.tanh %128 : vector<2x128xf32>
    %130 = vector.extract_strided_slice %115 {offsets = [0, 384], sizes = [2, 128], strides = [1, 1]} : vector<2x512xf32> to vector<2x128xf32>
    %131 = arith.negf %130 : vector<2x128xf32>
    %132 = math.exp %131 : vector<2x128xf32>
    %cst_38 = arith.constant 1.000000e+00 : f32
    %133 = vector.broadcast %cst_38 : f32 to vector<2x128xf32>
    %134 = arith.addf %133, %132 : vector<2x128xf32>
    %135 = arith.divf %133, %134 : vector<2x128xf32>
    %136 = arith.mulf %127, %89 : vector<2x128xf32>
    %137 = arith.mulf %121, %129 : vector<2x128xf32>
    %138 = arith.addf %136, %137 : vector<2x128xf32>
    %139 = math.tanh %138 : vector<2x128xf32>
    %140 = arith.mulf %135, %139 : vector<2x128xf32>
    %cst_39 = arith.constant 0.000000e+00 : f32
    %141 = vector.broadcast %cst_39 : f32 to vector<2x128xf32>
    %142 = arith.maximumf %140, %141 : vector<2x128xf32>
    %143 = arith.mulf %142, %5 : vector<2x128xf32>
    %cst_40 = arith.constant dense<0.000000e+00> : vector<2xf32>
    %144 = vector.multi_reduction <add>, %143, %cst_40 [1] : vector<2x128xf32> to vector<2xf32>
    %145 = vector.shape_cast %144 : vector<2xf32> to vector<2x1xf32>
    %146 = vector.broadcast %6 : vector<1x1xf32> to vector<2x1xf32>
    %147 = arith.addf %145, %146 : vector<2x1xf32>
    %148 = arith.negf %147 : vector<2x1xf32>
    %149 = math.exp %148 : vector<2x1xf32>
    %cst_41 = arith.constant 1.000000e+00 : f32
    %150 = vector.broadcast %cst_41 : f32 to vector<2x1xf32>
    %151 = arith.addf %150, %149 : vector<2x1xf32>
    %152 = arith.divf %150, %151 : vector<2x1xf32>
    %153 = vector.broadcast %c2_i32 : i32 to vector<2x8xi32>
    %154 = arith.cmpi eq, %7, %153 : vector<2x8xi32>
    %155 = vector.shape_cast %152 : vector<2x1xf32> to vector<2x1xf32>
    %156 = vector.broadcast %155 : vector<2x1xf32> to vector<2x8xf32>
    %157 = arith.select %154, %156, %108 : vector<2x8xi1>, vector<2x8xf32>
    %c3_i32 = arith.constant 3 : i32
    %158 = arith.index_cast %c3_i32 : i32 to index
    %c0_42 = arith.constant 0 : index
    %c0_43 = arith.constant 0 : index
    %159 = vector.load %arg1[%158, %c0_42, %c0_43] : memref<8x2x512xf32, #tpu.memory_space<vmem>>, vector<1x2x512xf32>
    %160 = vector.shape_cast %159 : vector<1x2x512xf32> to vector<2x512xf32>
    %161 = arith.truncf %140 : vector<2x128xf32> to vector<2x128xbf16>
    %c0_44 = arith.constant 0 : index
    %c0_45 = arith.constant 0 : index
    %162 = vector.load %arg2[%c0_44, %c0_45] : memref<128x512xbf16, #tpu.memory_space<vmem>>, vector<128x512xbf16>
    %cst_46 = arith.constant dense<0.000000e+00> : vector<2x512xf32>
    %163 = tpu.matmul %161, %162, %cst_46 {dimension_numbers = #tpu.dot_dimension_numbers<[1], [0], [0], [1], [0, 0, 1, 1], [], []>} : vector<2x128xbf16>, vector<128x512xbf16>, vector<2x512xf32> -> vector<2x512xf32>
    %164 = arith.addf %160, %163 : vector<2x512xf32>
    %165 = vector.extract_strided_slice %164 {offsets = [0, 0], sizes = [2, 128], strides = [1, 1]} : vector<2x512xf32> to vector<2x128xf32>
    %166 = arith.negf %165 : vector<2x128xf32>
    %167 = math.exp %166 : vector<2x128xf32>
    %cst_47 = arith.constant 1.000000e+00 : f32
    %168 = vector.broadcast %cst_47 : f32 to vector<2x128xf32>
    %169 = arith.addf %168, %167 : vector<2x128xf32>
    %170 = arith.divf %168, %169 : vector<2x128xf32>
    %171 = vector.extract_strided_slice %164 {offsets = [0, 128], sizes = [2, 128], strides = [1, 1]} : vector<2x512xf32> to vector<2x128xf32>
    %172 = arith.negf %171 : vector<2x128xf32>
    %173 = math.exp %172 : vector<2x128xf32>
    %cst_48 = arith.constant 1.000000e+00 : f32
    %174 = vector.broadcast %cst_48 : f32 to vector<2x128xf32>
    %175 = arith.addf %174, %173 : vector<2x128xf32>
    %176 = arith.divf %174, %175 : vector<2x128xf32>
    %177 = vector.extract_strided_slice %164 {offsets = [0, 256], sizes = [2, 128], strides = [1, 1]} : vector<2x512xf32> to vector<2x128xf32>
    %178 = math.tanh %177 : vector<2x128xf32>
    %179 = vector.extract_strided_slice %164 {offsets = [0, 384], sizes = [2, 128], strides = [1, 1]} : vector<2x512xf32> to vector<2x128xf32>
    %180 = arith.negf %179 : vector<2x128xf32>
    %181 = math.exp %180 : vector<2x128xf32>
    %cst_49 = arith.constant 1.000000e+00 : f32
    %182 = vector.broadcast %cst_49 : f32 to vector<2x128xf32>
    %183 = arith.addf %182, %181 : vector<2x128xf32>
    %184 = arith.divf %182, %183 : vector<2x128xf32>
    %185 = arith.mulf %176, %138 : vector<2x128xf32>
    %186 = arith.mulf %170, %178 : vector<2x128xf32>
    %187 = arith.addf %185, %186 : vector<2x128xf32>
    %188 = math.tanh %187 : vector<2x128xf32>
    %189 = arith.mulf %184, %188 : vector<2x128xf32>
    %cst_50 = arith.constant 0.000000e+00 : f32
    %190 = vector.broadcast %cst_50 : f32 to vector<2x128xf32>
    %191 = arith.maximumf %189, %190 : vector<2x128xf32>
    %192 = arith.mulf %191, %5 : vector<2x128xf32>
    %cst_51 = arith.constant dense<0.000000e+00> : vector<2xf32>
    %193 = vector.multi_reduction <add>, %192, %cst_51 [1] : vector<2x128xf32> to vector<2xf32>
    %194 = vector.shape_cast %193 : vector<2xf32> to vector<2x1xf32>
    %195 = vector.broadcast %6 : vector<1x1xf32> to vector<2x1xf32>
    %196 = arith.addf %194, %195 : vector<2x1xf32>
    %197 = arith.negf %196 : vector<2x1xf32>
    %198 = math.exp %197 : vector<2x1xf32>
    %cst_52 = arith.constant 1.000000e+00 : f32
    %199 = vector.broadcast %cst_52 : f32 to vector<2x1xf32>
    %200 = arith.addf %199, %198 : vector<2x1xf32>
    %201 = arith.divf %199, %200 : vector<2x1xf32>
    %202 = vector.broadcast %c3_i32 : i32 to vector<2x8xi32>
    %203 = arith.cmpi eq, %7, %202 : vector<2x8xi32>
    %204 = vector.shape_cast %201 : vector<2x1xf32> to vector<2x1xf32>
    %205 = vector.broadcast %204 : vector<2x1xf32> to vector<2x8xf32>
    %206 = arith.select %203, %205, %157 : vector<2x8xi1>, vector<2x8xf32>
    %c4_i32 = arith.constant 4 : i32
    %207 = arith.index_cast %c4_i32 : i32 to index
    %c0_53 = arith.constant 0 : index
    %c0_54 = arith.constant 0 : index
    %208 = vector.load %arg1[%207, %c0_53, %c0_54] : memref<8x2x512xf32, #tpu.memory_space<vmem>>, vector<1x2x512xf32>
    %209 = vector.shape_cast %208 : vector<1x2x512xf32> to vector<2x512xf32>
    %210 = arith.truncf %189 : vector<2x128xf32> to vector<2x128xbf16>
    %c0_55 = arith.constant 0 : index
    %c0_56 = arith.constant 0 : index
    %211 = vector.load %arg2[%c0_55, %c0_56] : memref<128x512xbf16, #tpu.memory_space<vmem>>, vector<128x512xbf16>
    %cst_57 = arith.constant dense<0.000000e+00> : vector<2x512xf32>
    %212 = tpu.matmul %210, %211, %cst_57 {dimension_numbers = #tpu.dot_dimension_numbers<[1], [0], [0], [1], [0, 0, 1, 1], [], []>} : vector<2x128xbf16>, vector<128x512xbf16>, vector<2x512xf32> -> vector<2x512xf32>
    %213 = arith.addf %209, %212 : vector<2x512xf32>
    %214 = vector.extract_strided_slice %213 {offsets = [0, 0], sizes = [2, 128], strides = [1, 1]} : vector<2x512xf32> to vector<2x128xf32>
    %215 = arith.negf %214 : vector<2x128xf32>
    %216 = math.exp %215 : vector<2x128xf32>
    %cst_58 = arith.constant 1.000000e+00 : f32
    %217 = vector.broadcast %cst_58 : f32 to vector<2x128xf32>
    %218 = arith.addf %217, %216 : vector<2x128xf32>
    %219 = arith.divf %217, %218 : vector<2x128xf32>
    %220 = vector.extract_strided_slice %213 {offsets = [0, 128], sizes = [2, 128], strides = [1, 1]} : vector<2x512xf32> to vector<2x128xf32>
    %221 = arith.negf %220 : vector<2x128xf32>
    %222 = math.exp %221 : vector<2x128xf32>
    %cst_59 = arith.constant 1.000000e+00 : f32
    %223 = vector.broadcast %cst_59 : f32 to vector<2x128xf32>
    %224 = arith.addf %223, %222 : vector<2x128xf32>
    %225 = arith.divf %223, %224 : vector<2x128xf32>
    %226 = vector.extract_strided_slice %213 {offsets = [0, 256], sizes = [2, 128], strides = [1, 1]} : vector<2x512xf32> to vector<2x128xf32>
    %227 = math.tanh %226 : vector<2x128xf32>
    %228 = vector.extract_strided_slice %213 {offsets = [0, 384], sizes = [2, 128], strides = [1, 1]} : vector<2x512xf32> to vector<2x128xf32>
    %229 = arith.negf %228 : vector<2x128xf32>
    %230 = math.exp %229 : vector<2x128xf32>
    %cst_60 = arith.constant 1.000000e+00 : f32
    %231 = vector.broadcast %cst_60 : f32 to vector<2x128xf32>
    %232 = arith.addf %231, %230 : vector<2x128xf32>
    %233 = arith.divf %231, %232 : vector<2x128xf32>
    %234 = arith.mulf %225, %187 : vector<2x128xf32>
    %235 = arith.mulf %219, %227 : vector<2x128xf32>
    %236 = arith.addf %234, %235 : vector<2x128xf32>
    %237 = math.tanh %236 : vector<2x128xf32>
    %238 = arith.mulf %233, %237 : vector<2x128xf32>
    %cst_61 = arith.constant 0.000000e+00 : f32
    %239 = vector.broadcast %cst_61 : f32 to vector<2x128xf32>
    %240 = arith.maximumf %238, %239 : vector<2x128xf32>
    %241 = arith.mulf %240, %5 : vector<2x128xf32>
    %cst_62 = arith.constant dense<0.000000e+00> : vector<2xf32>
    %242 = vector.multi_reduction <add>, %241, %cst_62 [1] : vector<2x128xf32> to vector<2xf32>
    %243 = vector.shape_cast %242 : vector<2xf32> to vector<2x1xf32>
    %244 = vector.broadcast %6 : vector<1x1xf32> to vector<2x1xf32>
    %245 = arith.addf %243, %244 : vector<2x1xf32>
    %246 = arith.negf %245 : vector<2x1xf32>
    %247 = math.exp %246 : vector<2x1xf32>
    %cst_63 = arith.constant 1.000000e+00 : f32
    %248 = vector.broadcast %cst_63 : f32 to vector<2x1xf32>
    %249 = arith.addf %248, %247 : vector<2x1xf32>
    %250 = arith.divf %248, %249 : vector<2x1xf32>
    %251 = vector.broadcast %c4_i32 : i32 to vector<2x8xi32>
    %252 = arith.cmpi eq, %7, %251 : vector<2x8xi32>
    %253 = vector.shape_cast %250 : vector<2x1xf32> to vector<2x1xf32>
    %254 = vector.broadcast %253 : vector<2x1xf32> to vector<2x8xf32>
    %255 = arith.select %252, %254, %206 : vector<2x8xi1>, vector<2x8xf32>
    %c5_i32 = arith.constant 5 : i32
    %256 = arith.index_cast %c5_i32 : i32 to index
    %c0_64 = arith.constant 0 : index
    %c0_65 = arith.constant 0 : index
    %257 = vector.load %arg1[%256, %c0_64, %c0_65] : memref<8x2x512xf32, #tpu.memory_space<vmem>>, vector<1x2x512xf32>
    %258 = vector.shape_cast %257 : vector<1x2x512xf32> to vector<2x512xf32>
    %259 = arith.truncf %238 : vector<2x128xf32> to vector<2x128xbf16>
    %c0_66 = arith.constant 0 : index
    %c0_67 = arith.constant 0 : index
    %260 = vector.load %arg2[%c0_66, %c0_67] : memref<128x512xbf16, #tpu.memory_space<vmem>>, vector<128x512xbf16>
    %cst_68 = arith.constant dense<0.000000e+00> : vector<2x512xf32>
    %261 = tpu.matmul %259, %260, %cst_68 {dimension_numbers = #tpu.dot_dimension_numbers<[1], [0], [0], [1], [0, 0, 1, 1], [], []>} : vector<2x128xbf16>, vector<128x512xbf16>, vector<2x512xf32> -> vector<2x512xf32>
    %262 = arith.addf %258, %261 : vector<2x512xf32>
    %263 = vector.extract_strided_slice %262 {offsets = [0, 0], sizes = [2, 128], strides = [1, 1]} : vector<2x512xf32> to vector<2x128xf32>
    %264 = arith.negf %263 : vector<2x128xf32>
    %265 = math.exp %264 : vector<2x128xf32>
    %cst_69 = arith.constant 1.000000e+00 : f32
    %266 = vector.broadcast %cst_69 : f32 to vector<2x128xf32>
    %267 = arith.addf %266, %265 : vector<2x128xf32>
    %268 = arith.divf %266, %267 : vector<2x128xf32>
    %269 = vector.extract_strided_slice %262 {offsets = [0, 128], sizes = [2, 128], strides = [1, 1]} : vector<2x512xf32> to vector<2x128xf32>
    %270 = arith.negf %269 : vector<2x128xf32>
    %271 = math.exp %270 : vector<2x128xf32>
    %cst_70 = arith.constant 1.000000e+00 : f32
    %272 = vector.broadcast %cst_70 : f32 to vector<2x128xf32>
    %273 = arith.addf %272, %271 : vector<2x128xf32>
    %274 = arith.divf %272, %273 : vector<2x128xf32>
    %275 = vector.extract_strided_slice %262 {offsets = [0, 256], sizes = [2, 128], strides = [1, 1]} : vector<2x512xf32> to vector<2x128xf32>
    %276 = math.tanh %275 : vector<2x128xf32>
    %277 = vector.extract_strided_slice %262 {offsets = [0, 384], sizes = [2, 128], strides = [1, 1]} : vector<2x512xf32> to vector<2x128xf32>
    %278 = arith.negf %277 : vector<2x128xf32>
    %279 = math.exp %278 : vector<2x128xf32>
    %cst_71 = arith.constant 1.000000e+00 : f32
    %280 = vector.broadcast %cst_71 : f32 to vector<2x128xf32>
    %281 = arith.addf %280, %279 : vector<2x128xf32>
    %282 = arith.divf %280, %281 : vector<2x128xf32>
    %283 = arith.mulf %274, %236 : vector<2x128xf32>
    %284 = arith.mulf %268, %276 : vector<2x128xf32>
    %285 = arith.addf %283, %284 : vector<2x128xf32>
    %286 = math.tanh %285 : vector<2x128xf32>
    %287 = arith.mulf %282, %286 : vector<2x128xf32>
    %cst_72 = arith.constant 0.000000e+00 : f32
    %288 = vector.broadcast %cst_72 : f32 to vector<2x128xf32>
    %289 = arith.maximumf %287, %288 : vector<2x128xf32>
    %290 = arith.mulf %289, %5 : vector<2x128xf32>
    %cst_73 = arith.constant dense<0.000000e+00> : vector<2xf32>
    %291 = vector.multi_reduction <add>, %290, %cst_73 [1] : vector<2x128xf32> to vector<2xf32>
    %292 = vector.shape_cast %291 : vector<2xf32> to vector<2x1xf32>
    %293 = vector.broadcast %6 : vector<1x1xf32> to vector<2x1xf32>
    %294 = arith.addf %292, %293 : vector<2x1xf32>
    %295 = arith.negf %294 : vector<2x1xf32>
    %296 = math.exp %295 : vector<2x1xf32>
    %cst_74 = arith.constant 1.000000e+00 : f32
    %297 = vector.broadcast %cst_74 : f32 to vector<2x1xf32>
    %298 = arith.addf %297, %296 : vector<2x1xf32>
    %299 = arith.divf %297, %298 : vector<2x1xf32>
    %300 = vector.broadcast %c5_i32 : i32 to vector<2x8xi32>
    %301 = arith.cmpi eq, %7, %300 : vector<2x8xi32>
    %302 = vector.shape_cast %299 : vector<2x1xf32> to vector<2x1xf32>
    %303 = vector.broadcast %302 : vector<2x1xf32> to vector<2x8xf32>
    %304 = arith.select %301, %303, %255 : vector<2x8xi1>, vector<2x8xf32>
    %c6_i32 = arith.constant 6 : i32
    %305 = arith.index_cast %c6_i32 : i32 to index
    %c0_75 = arith.constant 0 : index
    %c0_76 = arith.constant 0 : index
    %306 = vector.load %arg1[%305, %c0_75, %c0_76] : memref<8x2x512xf32, #tpu.memory_space<vmem>>, vector<1x2x512xf32>
    %307 = vector.shape_cast %306 : vector<1x2x512xf32> to vector<2x512xf32>
    %308 = arith.truncf %287 : vector<2x128xf32> to vector<2x128xbf16>
    %c0_77 = arith.constant 0 : index
    %c0_78 = arith.constant 0 : index
    %309 = vector.load %arg2[%c0_77, %c0_78] : memref<128x512xbf16, #tpu.memory_space<vmem>>, vector<128x512xbf16>
    %cst_79 = arith.constant dense<0.000000e+00> : vector<2x512xf32>
    %310 = tpu.matmul %308, %309, %cst_79 {dimension_numbers = #tpu.dot_dimension_numbers<[1], [0], [0], [1], [0, 0, 1, 1], [], []>} : vector<2x128xbf16>, vector<128x512xbf16>, vector<2x512xf32> -> vector<2x512xf32>
    %311 = arith.addf %307, %310 : vector<2x512xf32>
    %312 = vector.extract_strided_slice %311 {offsets = [0, 0], sizes = [2, 128], strides = [1, 1]} : vector<2x512xf32> to vector<2x128xf32>
    %313 = arith.negf %312 : vector<2x128xf32>
    %314 = math.exp %313 : vector<2x128xf32>
    %cst_80 = arith.constant 1.000000e+00 : f32
    %315 = vector.broadcast %cst_80 : f32 to vector<2x128xf32>
    %316 = arith.addf %315, %314 : vector<2x128xf32>
    %317 = arith.divf %315, %316 : vector<2x128xf32>
    %318 = vector.extract_strided_slice %311 {offsets = [0, 128], sizes = [2, 128], strides = [1, 1]} : vector<2x512xf32> to vector<2x128xf32>
    %319 = arith.negf %318 : vector<2x128xf32>
    %320 = math.exp %319 : vector<2x128xf32>
    %cst_81 = arith.constant 1.000000e+00 : f32
    %321 = vector.broadcast %cst_81 : f32 to vector<2x128xf32>
    %322 = arith.addf %321, %320 : vector<2x128xf32>
    %323 = arith.divf %321, %322 : vector<2x128xf32>
    %324 = vector.extract_strided_slice %311 {offsets = [0, 256], sizes = [2, 128], strides = [1, 1]} : vector<2x512xf32> to vector<2x128xf32>
    %325 = math.tanh %324 : vector<2x128xf32>
    %326 = vector.extract_strided_slice %311 {offsets = [0, 384], sizes = [2, 128], strides = [1, 1]} : vector<2x512xf32> to vector<2x128xf32>
    %327 = arith.negf %326 : vector<2x128xf32>
    %328 = math.exp %327 : vector<2x128xf32>
    %cst_82 = arith.constant 1.000000e+00 : f32
    %329 = vector.broadcast %cst_82 : f32 to vector<2x128xf32>
    %330 = arith.addf %329, %328 : vector<2x128xf32>
    %331 = arith.divf %329, %330 : vector<2x128xf32>
    %332 = arith.mulf %323, %285 : vector<2x128xf32>
    %333 = arith.mulf %317, %325 : vector<2x128xf32>
    %334 = arith.addf %332, %333 : vector<2x128xf32>
    %335 = math.tanh %334 : vector<2x128xf32>
    %336 = arith.mulf %331, %335 : vector<2x128xf32>
    %cst_83 = arith.constant 0.000000e+00 : f32
    %337 = vector.broadcast %cst_83 : f32 to vector<2x128xf32>
    %338 = arith.maximumf %336, %337 : vector<2x128xf32>
    %339 = arith.mulf %338, %5 : vector<2x128xf32>
    %cst_84 = arith.constant dense<0.000000e+00> : vector<2xf32>
    %340 = vector.multi_reduction <add>, %339, %cst_84 [1] : vector<2x128xf32> to vector<2xf32>
    %341 = vector.shape_cast %340 : vector<2xf32> to vector<2x1xf32>
    %342 = vector.broadcast %6 : vector<1x1xf32> to vector<2x1xf32>
    %343 = arith.addf %341, %342 : vector<2x1xf32>
    %344 = arith.negf %343 : vector<2x1xf32>
    %345 = math.exp %344 : vector<2x1xf32>
    %cst_85 = arith.constant 1.000000e+00 : f32
    %346 = vector.broadcast %cst_85 : f32 to vector<2x1xf32>
    %347 = arith.addf %346, %345 : vector<2x1xf32>
    %348 = arith.divf %346, %347 : vector<2x1xf32>
    %349 = vector.broadcast %c6_i32 : i32 to vector<2x8xi32>
    %350 = arith.cmpi eq, %7, %349 : vector<2x8xi32>
    %351 = vector.shape_cast %348 : vector<2x1xf32> to vector<2x1xf32>
    %352 = vector.broadcast %351 : vector<2x1xf32> to vector<2x8xf32>
    %353 = arith.select %350, %352, %304 : vector<2x8xi1>, vector<2x8xf32>
    %c7_i32 = arith.constant 7 : i32
    %354 = arith.index_cast %c7_i32 : i32 to index
    %c0_86 = arith.constant 0 : index
    %c0_87 = arith.constant 0 : index
    %355 = vector.load %arg1[%354, %c0_86, %c0_87] : memref<8x2x512xf32, #tpu.memory_space<vmem>>, vector<1x2x512xf32>
    %356 = vector.shape_cast %355 : vector<1x2x512xf32> to vector<2x512xf32>
    %357 = arith.truncf %336 : vector<2x128xf32> to vector<2x128xbf16>
    %c0_88 = arith.constant 0 : index
    %c0_89 = arith.constant 0 : index
    %358 = vector.load %arg2[%c0_88, %c0_89] : memref<128x512xbf16, #tpu.memory_space<vmem>>, vector<128x512xbf16>
    %cst_90 = arith.constant dense<0.000000e+00> : vector<2x512xf32>
    %359 = tpu.matmul %357, %358, %cst_90 {dimension_numbers = #tpu.dot_dimension_numbers<[1], [0], [0], [1], [0, 0, 1, 1], [], []>} : vector<2x128xbf16>, vector<128x512xbf16>, vector<2x512xf32> -> vector<2x512xf32>
    %360 = arith.addf %356, %359 : vector<2x512xf32>
    %361 = vector.extract_strided_slice %360 {offsets = [0, 0], sizes = [2, 128], strides = [1, 1]} : vector<2x512xf32> to vector<2x128xf32>
    %362 = arith.negf %361 : vector<2x128xf32>
    %363 = math.exp %362 : vector<2x128xf32>
    %cst_91 = arith.constant 1.000000e+00 : f32
    %364 = vector.broadcast %cst_91 : f32 to vector<2x128xf32>
    %365 = arith.addf %364, %363 : vector<2x128xf32>
    %366 = arith.divf %364, %365 : vector<2x128xf32>
    %367 = vector.extract_strided_slice %360 {offsets = [0, 128], sizes = [2, 128], strides = [1, 1]} : vector<2x512xf32> to vector<2x128xf32>
    %368 = arith.negf %367 : vector<2x128xf32>
    %369 = math.exp %368 : vector<2x128xf32>
    %cst_92 = arith.constant 1.000000e+00 : f32
    %370 = vector.broadcast %cst_92 : f32 to vector<2x128xf32>
    %371 = arith.addf %370, %369 : vector<2x128xf32>
    %372 = arith.divf %370, %371 : vector<2x128xf32>
    %373 = vector.extract_strided_slice %360 {offsets = [0, 256], sizes = [2, 128], strides = [1, 1]} : vector<2x512xf32> to vector<2x128xf32>
    %374 = math.tanh %373 : vector<2x128xf32>
    %375 = vector.extract_strided_slice %360 {offsets = [0, 384], sizes = [2, 128], strides = [1, 1]} : vector<2x512xf32> to vector<2x128xf32>
    %376 = arith.negf %375 : vector<2x128xf32>
    %377 = math.exp %376 : vector<2x128xf32>
    %cst_93 = arith.constant 1.000000e+00 : f32
    %378 = vector.broadcast %cst_93 : f32 to vector<2x128xf32>
    %379 = arith.addf %378, %377 : vector<2x128xf32>
    %380 = arith.divf %378, %379 : vector<2x128xf32>
    %381 = arith.mulf %372, %334 : vector<2x128xf32>
    %382 = arith.mulf %366, %374 : vector<2x128xf32>
    %383 = arith.addf %381, %382 : vector<2x128xf32>
    %384 = math.tanh %383 : vector<2x128xf32>
    %385 = arith.mulf %380, %384 : vector<2x128xf32>
    %cst_94 = arith.constant 0.000000e+00 : f32
    %386 = vector.broadcast %cst_94 : f32 to vector<2x128xf32>
    %387 = arith.maximumf %385, %386 : vector<2x128xf32>
    %388 = arith.mulf %387, %5 : vector<2x128xf32>
    %cst_95 = arith.constant dense<0.000000e+00> : vector<2xf32>
    %389 = vector.multi_reduction <add>, %388, %cst_95 [1] : vector<2x128xf32> to vector<2xf32>
    %390 = vector.shape_cast %389 : vector<2xf32> to vector<2x1xf32>
    %391 = vector.broadcast %6 : vector<1x1xf32> to vector<2x1xf32>
    %392 = arith.addf %390, %391 : vector<2x1xf32>
    %393 = arith.negf %392 : vector<2x1xf32>
    %394 = math.exp %393 : vector<2x1xf32>
    %cst_96 = arith.constant 1.000000e+00 : f32
    %395 = vector.broadcast %cst_96 : f32 to vector<2x1xf32>
    %396 = arith.addf %395, %394 : vector<2x1xf32>
    %397 = arith.divf %395, %396 : vector<2x1xf32>
    %398 = vector.broadcast %c7_i32 : i32 to vector<2x8xi32>
    %399 = arith.cmpi eq, %7, %398 : vector<2x8xi32>
    %400 = vector.shape_cast %397 : vector<2x1xf32> to vector<2x1xf32>
    %401 = vector.broadcast %400 : vector<2x1xf32> to vector<2x8xf32>
    %402 = arith.select %399, %401, %353 : vector<2x8xi1>, vector<2x8xf32>
    %c8_i32 = arith.constant 8 : i32
    %c0_97 = arith.constant 0 : index
    %c0_98 = arith.constant 0 : index
    %403 = vector.load %arg6[%c0_97, %c0_98] : memref<2x128xf32, #tpu.memory_space<vmem>>, vector<2x128xf32>
    tpu.vector_store %arg6[%c0_97, %c0_98], %385 {strides = array<i32>} : memref<2x128xf32, #tpu.memory_space<vmem>>, vector<2x128xf32>,
    %c0_99 = arith.constant 0 : index
    %c0_100 = arith.constant 0 : index
    %404 = vector.load %arg7[%c0_99, %c0_100] : memref<2x128xf32, #tpu.memory_space<vmem>>, vector<2x128xf32>
    tpu.vector_store %arg7[%c0_99, %c0_100], %383 {strides = array<i32>} : memref<2x128xf32, #tpu.memory_space<vmem>>, vector<2x128xf32>,
    %c0_101 = arith.constant 0 : index
    %c0_102 = arith.constant 0 : index
    %405 = vector.load %arg5[%c0_101, %c0_102] : memref<2x8xf32, #tpu.memory_space<vmem>>, vector<2x8xf32>
    tpu.vector_store %arg5[%c0_101, %c0_102], %402 {strides = array<i32>} : memref<2x8xf32, #tpu.memory_space<vmem>>, vector<2x8xf32>,
    return
  }
  func.func @transform_0(%arg0: i32) -> (i32, i32, i32) {
    %c0_i32 = arith.constant 0 : i32
    %c0_i32_0 = arith.constant 0 : i32
    %c0_i32_1 = arith.constant 0 : i32
    return %arg0, %c0_i32, %c0_i32_0 : i32, i32, i32
  }
  func.func @transform_1(%arg0: i32) -> (i32, i32) {
    %c0_i32 = arith.constant 0 : i32
    %c0_i32_0 = arith.constant 0 : i32
    %c0_i32_1 = arith.constant 0 : i32
    return %c0_i32, %c0_i32_0 : i32, i32
  }
  func.func @transform_2(%arg0: i32) -> (i32, i32) {
    %c0_i32 = arith.constant 0 : i32
    %c0_i32_0 = arith.constant 0 : i32
    %c0_i32_1 = arith.constant 0 : i32
    return %c0_i32, %c0_i32_0 : i32, i32
  }
  func.func @transform_3(%arg0: i32) -> (i32, i32) {
    %c0_i32 = arith.constant 0 : i32
    %c0_i32_0 = arith.constant 0 : i32
    %c0_i32_1 = arith.constant 0 : i32
    return %c0_i32, %c0_i32_0 : i32, i32
  }
  func.func @transform_4(%arg0: i32) -> (i32, i32) {
    %c0_i32 = arith.constant 0 : i32
    %c0_i32_0 = arith.constant 0 : i32
    return %c0_i32, %arg0 : i32, i32
  }
}

</mosaic_0001>

<llo_original>
// kernel: lstm_predict_padded.2
$region0: #{lstm_predict_padded.2}
  #allocation0 [shape = 'u32[]', space=smem, size = 0x4, offset = 0x4, fixed_abs, tag = 'smem constant byte address 0x4 - core index']
  #allocation1 [shape = 'u32[144,128]{1,0:T(1,128)}', space=vmem, size = 0x12000, scoped, tag = 'internal scratch']
  %s0 = inlined_call_operand.vmem [shape: f32[16,16], index: 0, kind: input, shape index: {}]
  %s1 = inlined_call_operand.vmem [shape: bf16[16,512], index: 1, kind: input, shape index: {}]
  %s2 = inlined_call_operand.hbm [shape: f32[1,512], index: 2, kind: input, shape index: {}]
  %s3 = inlined_call_operand.vmem [shape: f32[16,512], index: 3, kind: output, shape index: {}]
  %s4 = sld [smem:[#allocation0]]
  $region26: #{lstm_predict_padded.2} parent=0
    _
  %s6 = ssub.s32 1, %s4
  %s7 = scalar_select 0, %s6, %s4
  $region1: #{lstm_predict_padded.2} parent=0
    #allocation2 [shape = 'u8[2048]{0}', space=vmem, size = 0x800, scoped, tag = 'input window, operand 2, single buffered']
    #allocation3 [shape = 's32[1]{0}', space=sflag, size = 0x4, scoped, tag = 'scoped memory for lstm_predict_padded.2']
    %8 = vsyncpa [#allocation3], 0
    // Predicated region
    $region2: #{lstm_predict_padded.2} parent=1 // pred_check
      _
    $region3: #{lstm_predict_padded.2} parent=1 // pred_check_branch
      %10 = sbr.rel (0) target = $region5
    $region4: #{lstm_predict_padded.2} parent=1 // pred_region
      _
    $region5: #{lstm_predict_padded.2} parent=1 // pred_fallthru
      _
    // Predicated region
    $region6: #{lstm_predict_padded.2} parent=1 // pred_check
      _
    $region7: #{lstm_predict_padded.2} parent=1 // pred_check_branch
      %12 = sbr.rel (0) target = $region9
    $region8: #{lstm_predict_padded.2} parent=1 // pred_region
      _
    $region9: #{lstm_predict_padded.2} parent=1 // pred_fallthru
      _
    // Predicated region
    $region10: #{lstm_predict_padded.2} parent=1 // pred_check
      _
    $region11: #{lstm_predict_padded.2} parent=1 // pred_check_branch
      %14 = sbr.rel (0) target = $region13
    $region12: #{lstm_predict_padded.2} parent=1 // pred_region
      %s16 = ssub.s32 64, 64
      %17 = vsyncadd [#allocation3], %s16
      %s19 = sshll.u32 [#allocation2], 4
      %s20 = int_to_ptr.vmem [resolvable:$true] %s19
      %22 = dma.hbm_to_vmem [thread:$0]  %s2, 64, %s20, [#allocation3]
    $region13: #{lstm_predict_padded.2} parent=1 // pred_fallthru
      _
    // Predicated region
    $region14: #{lstm_predict_padded.2} parent=1 // pred_check
      _
    $region15: #{lstm_predict_padded.2} parent=1 // pred_check_branch
      %24 = sbr.rel (0) target = $region17
    $region16: #{lstm_predict_padded.2} parent=1 // pred_region
      %25 = dma.done [#allocation3], 64
    $region17: #{lstm_predict_padded.2} parent=1 // pred_fallthru
      _
    %v27 = vld [vmem:[%s0] sm:$0xff]
    %v28 = vld [vmem:[%s0 + $0x8] sm:$0xff]
    %v29 = vpack.c.bf16 %v28, %v27
    %v30 = vld [vmem:[%s1] sm:$0xff]
    %v31 = vld [vmem:[%s1 + $0x8] sm:$0xff]
    %v32 = vld [vmem:[%s1 + $0x10] sm:$0xff]
    %v33 = vld [vmem:[%s1 + $0x18] sm:$0xff]
    %v34 = vld [vmem:[#allocation2] sm:$0xf]
    %v36 = vlaneseq
    %v37 = vshrl.u32 %v36, 7
    %v38 = vsub.s32 0, %v37
    %v39 = vrot.slane %v34, %v38
    %v40 = vlaneseq
    %v41 = vshrl.u32 %v40, 7
    %v42 = vsub.s32 1, %v41
    %v43 = vrot.slane %v34, %v42
    %v44 = vlaneseq
    %v45 = vshrl.u32 %v44, 7
    %v46 = vsub.s32 2, %v45
    %v47 = vrot.slane %v34, %v46
    %v48 = vlaneseq
    %v49 = vshrl.u32 %v48, 7
    %v50 = vsub.s32 3, %v49
    %v51 = vrot.slane %v34, %v50
    %v60 = vunpack.c.l.b16 %v30
    %v61 = vunpack.c.h.b16 %v30
    %v62 = vunpack.c.l.b16 %v31
    %v63 = vunpack.c.h.b16 %v31
    %v64 = vunpack.c.l.b16 %v32
    %v65 = vunpack.c.h.b16 %v32
    %v66 = vunpack.c.l.b16 %v33
    %v67 = vunpack.c.h.b16 %v33
    %v68 = vpack.c.b16 %v64, %v60
    %v69 = vpack.c.b16 %v65, %v61
    %v70 = vpack.c.b16 %v66, %v62
    %v71 = vpack.c.b16 %v67, %v63
    %vm76 = vcmask 130048
    %v78 = vsel %vm76, %v29, 0
    %80 = vmatprep.subr.bf16.mxu0 %v69
    %81 = vmatpush1.bf16.msra.mxu0 %v68
    %82 = vmatprep.subr.bf16.mxu0 0
    %83 = vmatpush1.bf16.msra.mxu0 0
    %84 = vmatprep.subr.bf16.mxu0 0
    %85 = vmatpush1.bf16.msra.mxu0 0
    %86 = vmatprep.subr.bf16.mxu0 0
    %87 = vmatpush1.bf16.msra.mxu0 0
    %88 = vmatprep.subr.bf16.mxu0 0
    %89 = vmatpush1.bf16.msra.mxu0 0
    %90 = vmatprep.subr.bf16.mxu0 0
    %91 = vmatpush1.bf16.msra.mxu0 0
    %92 = vmatprep.subr.bf16.mxu0 0
    %93 = vmatpush1.bf16.msra.mxu0 0
    %94 = vmatprep.subr.bf16.mxu0 0
    %95 = vmatpush1.bf16.msra.mxu0 0
    %96 = vmatprep.subr.bf16.mxu0 0
    %97 = vmatpush1.bf16.msra.mxu0 0
    %98 = vmatprep.subr.bf16.mxu0 0
    %99 = vmatpush1.bf16.msra.mxu0 0
    %100 = vmatprep.subr.bf16.mxu0 0
    %101 = vmatpush1.bf16.msra.mxu0 0
    %102 = vmatprep.subr.bf16.mxu0 0
    %103 = vmatpush1.bf16.msra.mxu0 0
    %104 = vmatprep.subr.bf16.mxu0 0
    %105 = vmatpush1.bf16.msra.mxu0 0
    %106 = vmatprep.subr.bf16.mxu0 0
    %107 = vmatpush1.bf16.msra.mxu0 0
    %108 = vmatprep.subr.bf16.mxu0 0
    %109 = vmatpush1.bf16.msra.mxu0 0
    %110 = vmatprep.subr.bf16.mxu0 0
    %111 = vmatpush1.bf16.msra.mxu0 0
    %112 = vmatprep.mubr.bf16.mxu0 0
    %113 = vmatmul.mubr.bf16.gmra.mrb[0].mxu0 %v78
    %v114 = vpop.f32.mrb[0].mxu0
    %v115 = vadd.f32 %v39, %v114
    %v116 = vpop.f32.mrb[0].mxu0
    %v117 = vadd.f32 %v43, %v116
    %v118 = vpop.f32.mrb[0].mxu0
    %v119 = vadd.f32 %v39, %v118
    %v120 = vpop.f32.mrb[0].mxu0
    %v121 = vadd.f32 %v43, %v120
    %122 = vdwg.mxu0
    %123 = vmatprep.subr.bf16.mxu0 %v71
    %124 = vmatpush1.bf16.msra.mxu0 %v70
    %125 = vmatprep.subr.bf16.mxu0 0
    %126 = vmatpush1.bf16.msra.mxu0 0
    %127 = vmatprep.subr.bf16.mxu0 0
    %128 = vmatpush1.bf16.msra.mxu0 0
    %129 = vmatprep.subr.bf16.mxu0 0
    %130 = vmatpush1.bf16.msra.mxu0 0
    %131 = vmatprep.subr.bf16.mxu0 0
    %132 = vmatpush1.bf16.msra.mxu0 0
    %133 = vmatprep.subr.bf16.mxu0 0
    %134 = vmatpush1.bf16.msra.mxu0 0
    %135 = vmatprep.subr.bf16.mxu0 0
    %136 = vmatpush1.bf16.msra.mxu0 0
    %137 = vmatprep.subr.bf16.mxu0 0
    %138 = vmatpush1.bf16.msra.mxu0 0
    %139 = vmatprep.subr.bf16.mxu0 0
    %140 = vmatpush1.bf16.msra.mxu0 0
    %141 = vmatprep.subr.bf16.mxu0 0
    %142 = vmatpush1.bf16.msra.mxu0 0
    %143 = vmatprep.subr.bf16.mxu0 0
    %144 = vmatpush1.bf16.msra.mxu0 0
    %145 = vmatprep.subr.bf16.mxu0 0
    %146 = vmatpush1.bf16.msra.mxu0 0
    %147 = vmatprep.subr.bf16.mxu0 0
    %148 = vmatpush1.bf16.msra.mxu0 0
    %149 = vmatprep.subr.bf16.mxu0 0
    %150 = vmatpush1.bf16.msra.mxu0 0
    %151 = vmatprep.subr.bf16.mxu0 0
    %152 = vmatpush1.bf16.msra.mxu0 0
    %153 = vmatprep.subr.bf16.mxu0 0
    %154 = vmatpush1.bf16.msra.mxu0 0
    %155 = vmatprep.mubr.bf16.mxu0 0
    %156 = vmatmul.mubr.bf16.gmra.mrb[0].mxu0 %v78
    %v157 = vpop.f32.mrb[0].mxu0
    %v158 = vadd.f32 %v47, %v157
    %v159 = vpop.f32.mrb[0].mxu0
    %v160 = vadd.f32 %v51, %v159
    %v161 = vpop.f32.mrb[0].mxu0
    %v162 = vadd.f32 %v47, %v161
    %v163 = vpop.f32.mrb[0].mxu0
    %v164 = vadd.f32 %v51, %v163
    %165 = vdwg.mxu0
    %166 = vst [vmem:[%s3] sm:$0xff] %v115
    %167 = vst [vmem:[%s3 + $0x8] sm:$0xff] %v117
    %168 = vst [vmem:[%s3 + $0x10] sm:$0xff] %v158
    %169 = vst [vmem:[%s3 + $0x18] sm:$0xff] %v160
    %170 = vst [vmem:[%s3 + $0x20] sm:$0xff] %v119
    %171 = vst [vmem:[%s3 + $0x28] sm:$0xff] %v121
    %172 = vst [vmem:[%s3 + $0x30] sm:$0xff] %v162
    %173 = vst [vmem:[%s3 + $0x38] sm:$0xff] %v164
    // Predicated region
    $region18: #{lstm_predict_padded.2} parent=1 // pred_check
      _
    $region19: #{lstm_predict_padded.2} parent=1 // pred_check_branch
      %175 = sbr.rel (0) target = $region21
    $region20: #{lstm_predict_padded.2} parent=1 // pred_region
      _
    $region21: #{lstm_predict_padded.2} parent=1 // pred_fallthru
      _
    // Predicated region
    $region22: #{lstm_predict_padded.2} parent=1 // pred_check
      _
    $region23: #{lstm_predict_padded.2} parent=1 // pred_check_branch
      %177 = sbr.rel (0) target = $region25
    $region24: #{lstm_predict_padded.2} parent=1 // pred_region
      _
    $region25: #{lstm_predict_padded.2} parent=1 // pred_fallthru
      _
    %178 = vsyncpa [#allocation3], 1

// kernel: lstm_predict_padded.3
$region0: #{lstm_predict_padded.3}
  #allocation0 [shape = 'u32[]', space=smem, size = 0x4, offset = 0x4, fixed_abs, tag = 'smem constant byte address 0x4 - core index']
  #allocation1 [shape = 'u32[144,128]{1,0:T(1,128)}', space=vmem, size = 0x12000, scoped, tag = 'internal scratch']
  #allocation2 [shape = 'f32[2,128]{1,0:T(2,128)}', space=vmem, size = 0x400, scoped, tag = 'scratch operand']
  #allocation3 [shape = 'f32[2,128]{1,0:T(2,128)}', space=vmem, size = 0x400, scoped, tag = 'scratch operand']
  #allocation4 [shape = 'f32[1,1]{1,0:T(1,128)S(1)}', space=vmem, size = 0x200, scoped, tag = 'scoped memory for lstm_predict_padded.3']
  %s0 = inlined_call_operand.vmem [shape: f32[8,2,512], index: 0, kind: input, shape index: {}]
  %s1 = inlined_call_operand.vmem [shape: bf16[128,512], index: 1, kind: input, shape index: {}]
  %s2 = inlined_call_operand.vmem [shape: f32[1,128], index: 2, kind: input, shape index: {}]
  %s3 = inlined_call_operand.<no memory space> [shape: f32[1,1], index: 3, kind: input, shape index: {}]
  %s4 = inlined_call_operand.hbm [shape: f32[2,8], index: 4, kind: output, shape index: {}]
  %s5 = sld [smem:[#allocation0]]
  $region30: #{lstm_predict_padded.3} parent=0
    _
  %s7 = ssub.s32 1, %s5
  %s8 = scalar_select 0, %s7, %s5
  %v9 = vstv %s3
  %10 = vst [vmem:[#allocation4] sm:$0x1] %v9
  $region1: #{lstm_predict_padded.3} parent=0
    #allocation5 [shape = 'u8[1024]{0}', space=vmem, size = 0x400, scoped, tag = 'output window, operand 0, single buffered']
    #allocation6 [shape = 's32[1]{0}', space=sflag, size = 0x4, scoped, tag = 'scoped memory for lstm_predict_padded.3']
    %11 = vsyncpa [#allocation6], 0
    // Predicated region
    $region2: #{lstm_predict_padded.3} parent=1 // pred_check
      _
    $region3: #{lstm_predict_padded.3} parent=1 // pred_check_branch
      %13 = sbr.rel (0) target = $region5
    $region4: #{lstm_predict_padded.3} parent=1 // pred_region
      _
    $region5: #{lstm_predict_padded.3} parent=1 // pred_fallthru
      _
    // Predicated region
    $region6: #{lstm_predict_padded.3} parent=1 // pred_check
      _
    $region7: #{lstm_predict_padded.3} parent=1 // pred_check_branch
      %15 = sbr.rel (0) target = $region9
    $region8: #{lstm_predict_padded.3} parent=1 // pred_region
      _
    $region9: #{lstm_predict_padded.3} parent=1 // pred_fallthru
      _
    // Predicated region
    $region10: #{lstm_predict_padded.3} parent=1 // pred_check
      _
    $region11: #{lstm_predict_padded.3} parent=1 // pred_check_branch
      %17 = sbr.rel (0) target = $region13
    $region12: #{lstm_predict_padded.3} parent=1 // pred_region
      _
    $region13: #{lstm_predict_padded.3} parent=1 // pred_fallthru
      _
    // Predicated region
    $region14: #{lstm_predict_padded.3} parent=1 // pred_check
      _
    $region15: #{lstm_predict_padded.3} parent=1 // pred_check_branch
      %19 = sbr.rel (0) target = $region17
    $region16: #{lstm_predict_padded.3} parent=1 // pred_region
      _
    $region17: #{lstm_predict_padded.3} parent=1 // pred_fallthru
      _
    %p21 = scmp.eq.s32.totalorder 0, 0
    // Predicated region
    $region18: #{lstm_predict_padded.3} parent=1 // pred_check
      %p22 = pneg %p21
    $region19: #{lstm_predict_padded.3} parent=1 // pred_check_branch
      %24 = sbr.rel (%p22) target = $region21
    $region20: #{lstm_predict_padded.3} parent=1 // pred_region
      %25 = vst [vmem:[#allocation2] sm:$0x3] 0.0
      %26 = vst [vmem:[#allocation3] sm:$0x3] 0.0
    $region21: #{lstm_predict_padded.3} parent=1 // pred_fallthru
      _
    %v27 = vld [vmem:[%s2] sm:$0x1]
    %v29 = vlaneseq
    %v30 = vshrl.u32 %v29, 7
    %v31 = vsub.s32 0, %v30
    %v32 = vrot.slane %v27, %v31
    %v34 = vld [vmem:[#allocation4] sm:$0x1]
    %v35 = vlaneseq
    %v36 = vand.u32 %v35, 127
    %v37 = vld [vmem:[#allocation2] sm:$0x3]
    %v38 = vld [vmem:[#allocation3] sm:$0x3]
    %v39 = vld [vmem:[%s0] sm:$0xff]
    %v40 = vpack.c.bf16 %v37, %v37
    %v41 = vld [vmem:[%s1] sm:$0xff]
    %v42 = vld [vmem:[%s1 + $0x8] sm:$0xff]
    %v43 = vld [vmem:[%s1 + $0x10] sm:$0xff]
    %v44 = vld [vmem:[%s1 + $0x18] sm:$0xff]
    %v45 = vld [vmem:[%s1 + $0x20] sm:$0xff]
    %v46 = vld [vmem:[%s1 + $0x28] sm:$0xff]
    %v47 = vld [vmem:[%s1 + $0x30] sm:$0xff]
    %v48 = vld [vmem:[%s1 + $0x38] sm:$0xff]
    %v49 = vld [vmem:[%s1 + $0x40] sm:$0xff]
    %v50 = vld [vmem:[%s1 + $0x48] sm:$0xff]
    %v51 = vld [vmem:[%s1 + $0x50] sm:$0xff]
    %v52 = vld [vmem:[%s1 + $0x58] sm:$0xff]
    %v53 = vld [vmem:[%s1 + $0x60] sm:$0xff]
    %v54 = vld [vmem:[%s1 + $0x68] sm:$0xff]
    %v55 = vld [vmem:[%s1 + $0x70] sm:$0xff]
    %v56 = vld [vmem:[%s1 + $0x78] sm:$0xff]
    %v57 = vld [vmem:[%s1 + $0x80] sm:$0xff]
    %v58 = vld [vmem:[%s1 + $0x88] sm:$0xff]
    %v59 = vld [vmem:[%s1 + $0x90] sm:$0xff]
    %v60 = vld [vmem:[%s1 + $0x98] sm:$0xff]
    %v61 = vld [vmem:[%s1 + $0xa0] sm:$0xff]
    %v62 = vld [vmem:[%s1 + $0xa8] sm:$0xff]
    %v63 = vld [vmem:[%s1 + $0xb0] sm:$0xff]
    %v64 = vld [vmem:[%s1 + $0xb8] sm:$0xff]
    %v65 = vld [vmem:[%s1 + $0xc0] sm:$0xff]
    %v66 = vld [vmem:[%s1 + $0xc8] sm:$0xff]
    %v67 = vld [vmem:[%s1 + $0xd0] sm:$0xff]
    %v68 = vld [vmem:[%s1 + $0xd8] sm:$0xff]
    %v69 = vld [vmem:[%s1 + $0xe0] sm:$0xff]
    %v70 = vld [vmem:[%s1 + $0xe8] sm:$0xff]
    %v71 = vld [vmem:[%s1 + $0xf0] sm:$0xff]
    %v72 = vld [vmem:[%s1 + $0xf8] sm:$0xff]
    %v105 = vunpack.c.l.b16 %v41
    %v106 = vunpack.c.h.b16 %v41
    %v107 = vunpack.c.l.b16 %v42
    %v108 = vunpack.c.h.b16 %v42
    %v109 = vunpack.c.l.b16 %v43
    %v110 = vunpack.c.h.b16 %v43
    %v111 = vunpack.c.l.b16 %v44
    %v112 = vunpack.c.h.b16 %v44
    %v113 = vunpack.c.l.b16 %v45
    %v114 = vunpack.c.h.b16 %v45
    %v115 = vunpack.c.l.b16 %v46
    %v116 = vunpack.c.h.b16 %v46
    %v117 = vunpack.c.l.b16 %v47
    %v118 = vunpack.c.h.b16 %v47
    %v119 = vunpack.c.l.b16 %v48
    %v120 = vunpack.c.h.b16 %v48
    %v121 = vunpack.c.l.b16 %v49
    %v122 = vunpack.c.h.b16 %v49
    %v123 = vunpack.c.l.b16 %v50
    %v124 = vunpack.c.h.b16 %v50
    %v125 = vunpack.c.l.b16 %v51
    %v126 = vunpack.c.h.b16 %v51
    %v127 = vunpack.c.l.b16 %v52
    %v128 = vunpack.c.h.b16 %v52
    %v129 = vunpack.c.l.b16 %v53
    %v130 = vunpack.c.h.b16 %v53
    %v131 = vunpack.c.l.b16 %v54
    %v132 = vunpack.c.h.b16 %v54
    %v133 = vunpack.c.l.b16 %v55
    %v134 = vunpack.c.h.b16 %v55
    %v135 = vunpack.c.l.b16 %v56
    %v136 = vunpack.c.h.b16 %v56
    %v137 = vunpack.c.l.b16 %v57
    %v138 = vunpack.c.h.b16 %v57
    %v139 = vunpack.c.l.b16 %v58
    %v140 = vunpack.c.h.b16 %v58
    %v141 = vunpack.c.l.b16 %v59
    %v142 = vunpack.c.h.b16 %v59
    %v143 = vunpack.c.l.b16 %v60
    %v144 = vunpack.c.h.b16 %v60
    %v145 = vunpack.c.l.b16 %v61
    %v146 = vunpack.c.h.b16 %v61
    %v147 = vunpack.c.l.b16 %v62
    %v148 = vunpack.c.h.b16 %v62
    %v149 = vunpack.c.l.b16 %v63
    %v150 = vunpack.c.h.b16 %v63
    %v151 = vunpack.c.l.b16 %v64
    %v152 = vunpack.c.h.b16 %v64
    %v153 = vunpack.c.l.b16 %v65
    %v154 = vunpack.c.h.b16 %v65
    %v155 = vunpack.c.l.b16 %v66
    %v156 = vunpack.c.h.b16 %v66
    %v157 = vunpack.c.l.b16 %v67
    %v158 = vunpack.c.h.b16 %v67
    %v159 = vunpack.c.l.b16 %v68
    %v160 = vunpack.c.h.b16 %v68
    %v161 = vunpack.c.l.b16 %v69
    %v162 = vunpack.c.h.b16 %v69
    %v163 = vunpack.c.l.b16 %v70
    %v164 = vunpack.c.h.b16 %v70
    %v165 = vunpack.c.l.b16 %v71
    %v166 = vunpack.c.h.b16 %v71
    %v167 = vunpack.c.l.b16 %v72
    %v168 = vunpack.c.h.b16 %v72
    %v169 = vpack.c.b16 %v109, %v105
    %v170 = vpack.c.b16 %v110, %v106
    %v171 = vpack.c.b16 %v111, %v107
    %v172 = vpack.c.b16 %v112, %v108
    %v173 = vpack.c.b16 %v117, %v113
    %v174 = vpack.c.b16 %v118, %v114
    %v175 = vpack.c.b16 %v119, %v115
    %v176 = vpack.c.b16 %v120, %v116
    %v177 = vpack.c.b16 %v125, %v121
    %v178 = vpack.c.b16 %v126, %v122
    %v179 = vpack.c.b16 %v127, %v123
    %v180 = vpack.c.b16 %v128, %v124
    %v181 = vpack.c.b16 %v133, %v129
    %v182 = vpack.c.b16 %v134, %v130
    %v183 = vpack.c.b16 %v135, %v131
    %v184 = vpack.c.b16 %v136, %v132
    %v185 = vpack.c.b16 %v141, %v137
    %v186 = vpack.c.b16 %v142, %v138
    %v187 = vpack.c.b16 %v143, %v139
    %v188 = vpack.c.b16 %v144, %v140
    %v189 = vpack.c.b16 %v149, %v145
    %v190 = vpack.c.b16 %v150, %v146
    %v191 = vpack.c.b16 %v151, %v147
    %v192 = vpack.c.b16 %v152, %v148
    %v193 = vpack.c.b16 %v157, %v153
    %v194 = vpack.c.b16 %v158, %v154
    %v195 = vpack.c.b16 %v159, %v155
    %v196 = vpack.c.b16 %v160, %v156
    %v197 = vpack.c.b16 %v165, %v161
    %v198 = vpack.c.b16 %v166, %v162
    %v199 = vpack.c.b16 %v167, %v163
    %v200 = vpack.c.b16 %v168, %v164
    %233 = vmatprep.subr.bf16.mxu0 %v170
    %234 = vmatpush1.bf16.msra.mxu0 %v169
    %235 = vmatprep.subr.bf16.mxu0 %v174
    %236 = vmatpush1.bf16.msra.mxu0 %v173
    %237 = vmatprep.subr.bf16.mxu0 %v178
    %238 = vmatpush1.bf16.msra.mxu0 %v177
    %239 = vmatprep.subr.bf16.mxu0 %v182
    %240 = vmatpush1.bf16.msra.mxu0 %v181
    %241 = vmatprep.subr.bf16.mxu0 %v186
    %242 = vmatpush1.bf16.msra.mxu0 %v185
    %243 = vmatprep.subr.bf16.mxu0 %v190
    %244 = vmatpush1.bf16.msra.mxu0 %v189
    %245 = vmatprep.subr.bf16.mxu0 %v194
    %246 = vmatpush1.bf16.msra.mxu0 %v193
    %247 = vmatprep.subr.bf16.mxu0 %v198
    %248 = vmatpush1.bf16.msra.mxu0 %v197
    %249 = vmatprep.subr.bf16.mxu0 0
    %250 = vmatpush1.bf16.msra.mxu0 0
    %251 = vmatprep.subr.bf16.mxu0 0
    %252 = vmatpush1.bf16.msra.mxu0 0
    %253 = vmatprep.subr.bf16.mxu0 0
    %254 = vmatpush1.bf16.msra.mxu0 0
    %255 = vmatprep.subr.bf16.mxu0 0
    %256 = vmatpush1.bf16.msra.mxu0 0
    %257 = vmatprep.subr.bf16.mxu0 0
    %258 = vmatpush1.bf16.msra.mxu0 0
    %259 = vmatprep.subr.bf16.mxu0 0
    %260 = vmatpush1.bf16.msra.mxu0 0
    %261 = vmatprep.subr.bf16.mxu0 0
    %262 = vmatpush1.bf16.msra.mxu0 0
    %263 = vmatprep.subr.bf16.mxu0 0
    %264 = vmatpush1.bf16.msra.mxu0 0
    %265 = vmatprep.mubr.bf16.mxu0 0
    %266 = vmatmul.mubr.bf16.gmra.mrb[0].mxu0 %v40
    %v267 = vpop.f32.mrb[0].mxu0
    %v268 = vadd.f32 0.0, %v267
    %v269 = vpop.f32.mrb[0].mxu0
    %v270 = vadd.f32 0.0, %v269
    %v271 = vpop.f32.mrb[0].mxu0
    %v272 = vpop.f32.mrb[0].mxu0
    %273 = vdwg.mxu0
    %274 = vmatprep.subr.bf16.mxu0 %v172
    %275 = vmatpush1.bf16.msra.mxu0 %v171
    %276 = vmatprep.subr.bf16.mxu0 %v176
    %277 = vmatpush1.bf16.msra.mxu0 %v175
    %278 = vmatprep.subr.bf16.mxu0 %v180
    %279 = vmatpush1.bf16.msra.mxu0 %v179
    %280 = vmatprep.subr.bf16.mxu0 %v184
    %281 = vmatpush1.bf16.msra.mxu0 %v183
    %282 = vmatprep.subr.bf16.mxu0 %v188
    %283 = vmatpush1.bf16.msra.mxu0 %v187
    %284 = vmatprep.subr.bf16.mxu0 %v192
    %285 = vmatpush1.bf16.msra.mxu0 %v191
    %286 = vmatprep.subr.bf16.mxu0 %v196
    %287 = vmatpush1.bf16.msra.mxu0 %v195
    %288 = vmatprep.subr.bf16.mxu0 %v200
    %289 = vmatpush1.bf16.msra.mxu0 %v199
    %290 = vmatprep.subr.bf16.mxu0 0
    %291 = vmatpush1.bf16.msra.mxu0 0
    %292 = vmatprep.subr.bf16.mxu0 0
    %293 = vmatpush1.bf16.msra.mxu0 0
    %294 = vmatprep.subr.bf16.mxu0 0
    %295 = vmatpush1.bf16.msra.mxu0 0
    %296 = vmatprep.subr.bf16.mxu0 0
    %297 = vmatpush1.bf16.msra.mxu0 0
    %298 = vmatprep.subr.bf16.mxu0 0
    %299 = vmatpush1.bf16.msra.mxu0 0
    %300 = vmatprep.subr.bf16.mxu0 0
    %301 = vmatpush1.bf16.msra.mxu0 0
    %302 = vmatprep.subr.bf16.mxu0 0
    %303 = vmatpush1.bf16.msra.mxu0 0
    %304 = vmatprep.subr.bf16.mxu0 0
    %305 = vmatpush1.bf16.msra.mxu0 0
    %306 = vmatprep.mubr.bf16.mxu0 0
    %307 = vmatmul.mubr.bf16.gmra.mrb[0].mxu0 %v40
    %v308 = vpop.f32.mrb[0].mxu0
    %v309 = vadd.f32 0.0, %v308
    %v310 = vpop.f32.mrb[0].mxu0
    %v311 = vadd.f32 0.0, %v310
    %v312 = vpop.f32.mrb[0].mxu0
    %v313 = vpop.f32.mrb[0].mxu0
    %314 = vdwg.mxu0
    %v319 = vcombine.low %v268, %v270
    %v320 = vcombine.low %v309, %v311
    %v322 = vunpack.c.l.s4 1983009808
    %v323 = vunpack.c.0.s8 %v322
    %v324 = vlaneseq
    %v325 = vshrl.u32 %v324, 7
    %v326 = vsub.s32 %v323, %v325
    %v327 = vrot.slane %v319, %v326
    %v329 = vunpack.c.l.s4 1983009808
    %v330 = vunpack.c.0.s8 %v329
    %v331 = vlaneseq
    %v332 = vshrl.u32 %v331, 7
    %v333 = vsub.s32 %v330, %v332
    %v334 = vrot.slane %v320, %v333
    %v335 = vcombine.low %v327, %v334
    %v337 = vadd.f32 %v39, %v335
    %v338 = vxor.u32 %v337, 2147483648
    %v339 = vmul.f32 %v338, 1.442695
    %v340 = vpow.pop %v339
    %v341 = vadd.f32 %v340, 1.0
    %v342 = vrcp.pop %v341
    %v343 = vmul.f32 1.0, %v342
    %v345 = vrot.slane %v337, 2
    %v347 = vxor.u32 %v345, 2147483648
    %v348 = vmul.f32 %v347, 1.442695
    %v349 = vpow.pop %v348
    %v350 = vadd.f32 %v349, 1.0
    %v351 = vrcp.pop %v350
    %v352 = vmul.f32 1.0, %v351
    %v353 = vrot.slane %v337, 4
    %v355 = vtanh.pop %v353
    %v356 = vrot.slane %v337, 6
    %v358 = vxor.u32 %v356, 2147483648
    %v359 = vmul.f32 %v358, 1.442695
    %v360 = vpow.pop %v359
    %v361 = vadd.f32 %v360, 1.0
    %v362 = vrcp.pop %v361
    %v363 = vmul.f32 1.0, %v362
    %v364 = vmul.f32 %v352, %v38
    %v365 = vmul.f32 %v343, %v355
    %v366 = vadd.f32 %v364, %v365
    %v367 = vtanh.pop %v366
    %v368 = vmul.f32 %v363, %v367
    %v369 = vmax.f32 %v368, 0.0
    %v370 = vmul.f32 %v369, %v32
    %vm371 = vcmask 1041408
    %v372 = vsel %vm371, %v370, 0.0
    %373 = vadd.xlane.f32.xlu0 %v372
    %v374 = vpop.xlane.xlu0 %373
    %v376 = vlaneseq
    %v377 = vshrl.u32 %v376, 7
    %v378 = vsub.s32 0, %v377
    %v379 = vrot.slane %v34, %v378
    %v381 = vadd.f32 %v374, %v379
    %v382 = vxor.u32 %v381, 2147483648
    %v383 = vmul.f32 %v382, 1.442695
    %v384 = vpow.pop %v383
    %v385 = vadd.f32 %v384, 1.0
    %v386 = vrcp.pop %v385
    %v387 = vmul.f32 1.0, %v386
    %vm388 = vcmp.eq.s32.totalorder %v36, 0
    %390 = vset.pattern.permute.xlu0 0
    %391 = vperm.xlu0 %390, %v387
    %v392 = vpop.permute.xlu0 %391
    %v394 = vsel %vm388, %v392, 0.0
    %s395 = scalar_lea.vmem %s0, 8
    %v396 = vld [vmem:[%s395] sm:$0xff]
    %v397 = vpack.c.bf16 %v368, %v368
    %398 = vmatprep.subr.bf16.mxu0 %v170
    %399 = vmatpush1.bf16.msra.mxu0 %v169
    %400 = vmatprep.subr.bf16.mxu0 %v174
    %401 = vmatpush1.bf16.msra.mxu0 %v173
    %402 = vmatprep.subr.bf16.mxu0 %v178
    %403 = vmatpush1.bf16.msra.mxu0 %v177
    %404 = vmatprep.subr.bf16.mxu0 %v182
    %405 = vmatpush1.bf16.msra.mxu0 %v181
    %406 = vmatprep.subr.bf16.mxu0 %v186
    %407 = vmatpush1.bf16.msra.mxu0 %v185
    %408 = vmatprep.subr.bf16.mxu0 %v190
    %409 = vmatpush1.bf16.msra.mxu0 %v189
    %410 = vmatprep.subr.bf16.mxu0 %v194
    %411 = vmatpush1.bf16.msra.mxu0 %v193
    %412 = vmatprep.subr.bf16.mxu0 %v198
    %413 = vmatpush1.bf16.msra.mxu0 %v197
    %414 = vmatprep.subr.bf16.mxu0 0
    %415 = vmatpush1.bf16.msra.mxu0 0
    %416 = vmatprep.subr.bf16.mxu0 0
    %417 = vmatpush1.bf16.msra.mxu0 0
    %418 = vmatprep.subr.bf16.mxu0 0
    %419 = vmatpush1.bf16.msra.mxu0 0
    %420 = vmatprep.subr.bf16.mxu0 0
    %421 = vmatpush1.bf16.msra.mxu0 0
    %422 = vmatprep.subr.bf16.mxu0 0
    %423 = vmatpush1.bf16.msra.mxu0 0
    %424 = vmatprep.subr.bf16.mxu0 0
    %425 = vmatpush1.bf16.msra.mxu0 0
    %426 = vmatprep.subr.bf16.mxu0 0
    %427 = vmatpush1.bf16.msra.mxu0 0
    %428 = vmatprep.subr.bf16.mxu0 0
    %429 = vmatpush1.bf16.msra.mxu0 0
    %430 = vmatprep.mubr.bf16.mxu0 0
    %431 = vmatmul.mubr.bf16.gmra.mrb[0].mxu0 %v397
    %v432 = vpop.f32.mrb[0].mxu0
    %v433 = vadd.f32 0.0, %v432
    %v434 = vpop.f32.mrb[0].mxu0
    %v435 = vadd.f32 0.0, %v434
    %v436 = vpop.f32.mrb[0].mxu0
    %v437 = vpop.f32.mrb[0].mxu0
    %438 = vdwg.mxu0
    %439 = vmatprep.subr.bf16.mxu0 %v172
    %440 = vmatpush1.bf16.msra.mxu0 %v171
    %441 = vmatprep.subr.bf16.mxu0 %v176
    %442 = vmatpush1.bf16.msra.mxu0 %v175
    %443 = vmatprep.subr.bf16.mxu0 %v180
    %444 = vmatpush1.bf16.msra.mxu0 %v179
    %445 = vmatprep.subr.bf16.mxu0 %v184
    %446 = vmatpush1.bf16.msra.mxu0 %v183
    %447 = vmatprep.subr.bf16.mxu0 %v188
    %448 = vmatpush1.bf16.msra.mxu0 %v187
    %449 = vmatprep.subr.bf16.mxu0 %v192
    %450 = vmatpush1.bf16.msra.mxu0 %v191
    %451 = vmatprep.subr.bf16.mxu0 %v196
    %452 = vmatpush1.bf16.msra.mxu0 %v195
    %453 = vmatprep.subr.bf16.mxu0 %v200
    %454 = vmatpush1.bf16.msra.mxu0 %v199
    %455 = vmatprep.subr.bf16.mxu0 0
    %456 = vmatpush1.bf16.msra.mxu0 0
    %457 = vmatprep.subr.bf16.mxu0 0
    %458 = vmatpush1.bf16.msra.mxu0 0
    %459 = vmatprep.subr.bf16.mxu0 0
    %460 = vmatpush1.bf16.msra.mxu0 0
    %461 = vmatprep.subr.bf16.mxu0 0
    %462 = vmatpush1.bf16.msra.mxu0 0
    %463 = vmatprep.subr.bf16.mxu0 0
    %464 = vmatpush1.bf16.msra.mxu0 0
    %465 = vmatprep.subr.bf16.mxu0 0
    %466 = vmatpush1.bf16.msra.mxu0 0
    %467 = vmatprep.subr.bf16.mxu0 0
    %468 = vmatpush1.bf16.msra.mxu0 0
    %469 = vmatprep.subr.bf16.mxu0 0
    %470 = vmatpush1.bf16.msra.mxu0 0
    %471 = vmatprep.mubr.bf16.mxu0 0
    %472 = vmatmul.mubr.bf16.gmra.mrb[0].mxu0 %v397
    %v473 = vpop.f32.mrb[0].mxu0
    %v474 = vadd.f32 0.0, %v473
    %v475 = vpop.f32.mrb[0].mxu0
    %v476 = vadd.f32 0.0, %v475
    %v477 = vpop.f32.mrb[0].mxu0
    %v478 = vpop.f32.mrb[0].mxu0
    %479 = vdwg.mxu0
    %v484 = vcombine.low %v433, %v435
    %v485 = vcombine.low %v474, %v476
    %v487 = vunpack.c.l.s4 1983009808
    %v488 = vunpack.c.0.s8 %v487
    %v489 = vlaneseq
    %v490 = vshrl.u32 %v489, 7
    %v491 = vsub.s32 %v488, %v490
    %v492 = vrot.slane %v484, %v491
    %v494 = vunpack.c.l.s4 1983009808
    %v495 = vunpack.c.0.s8 %v494
    %v496 = vlaneseq
    %v497 = vshrl.u32 %v496, 7
    %v498 = vsub.s32 %v495, %v497
    %v499 = vrot.slane %v485, %v498
    %v500 = vcombine.low %v492, %v499
    %v502 = vadd.f32 %v396, %v500
    %v503 = vxor.u32 %v502, 2147483648
    %v504 = vmul.f32 %v503, 1.442695
    %v505 = vpow.pop %v504
    %v506 = vadd.f32 %v505, 1.0
    %v507 = vrcp.pop %v506
    %v508 = vmul.f32 1.0, %v507
    %v510 = vrot.slane %v502, 2
    %v512 = vxor.u32 %v510, 2147483648
    %v513 = vmul.f32 %v512, 1.442695
    %v514 = vpow.pop %v513
    %v515 = vadd.f32 %v514, 1.0
    %v516 = vrcp.pop %v515
    %v517 = vmul.f32 1.0, %v516
    %v518 = vrot.slane %v502, 4
    %v520 = vtanh.pop %v518
    %v521 = vrot.slane %v502, 6
    %v523 = vxor.u32 %v521, 2147483648
    %v524 = vmul.f32 %v523, 1.442695
    %v525 = vpow.pop %v524
    %v526 = vadd.f32 %v525, 1.0
    %v527 = vrcp.pop %v526
    %v528 = vmul.f32 1.0, %v527
    %v529 = vmul.f32 %v517, %v366
    %v530 = vmul.f32 %v508, %v520
    %v531 = vadd.f32 %v529, %v530
    %v532 = vtanh.pop %v531
    %v533 = vmul.f32 %v528, %v532
    %v534 = vmax.f32 %v533, 0.0
    %v535 = vmul.f32 %v534, %v32
    %v536 = vsel %vm371, %v535, 0.0
    %537 = vadd.xlane.f32.xlu0 %v536
    %v538 = vpop.xlane.xlu0 %537
    %v539 = vadd.f32 %v538, %v379
    %v540 = vxor.u32 %v539, 2147483648
    %v541 = vmul.f32 %v540, 1.442695
    %v542 = vpow.pop %v541
    %v543 = vadd.f32 %v542, 1.0
    %v544 = vrcp.pop %v543
    %v545 = vmul.f32 1.0, %v544
    %vm546 = vcmp.eq.s32.totalorder %v36, 1
    %548 = vset.pattern.permute.xlu0 0
    %549 = vperm.xlu0 %548, %v545
    %v550 = vpop.permute.xlu0 %549
    %v552 = vsel %vm546, %v550, %v394
    %s553 = scalar_lea.vmem %s0, 16
    %v554 = vld [vmem:[%s553] sm:$0xff]
    %v555 = vpack.c.bf16 %v533, %v533
    %556 = vmatprep.subr.bf16.mxu0 %v170
    %557 = vmatpush1.bf16.msra.mxu0 %v169
    %558 = vmatprep.subr.bf16.mxu0 %v174
    %559 = vmatpush1.bf16.msra.mxu0 %v173
    %560 = vmatprep.subr.bf16.mxu0 %v178
    %561 = vmatpush1.bf16.msra.mxu0 %v177
    %562 = vmatprep.subr.bf16.mxu0 %v182
    %563 = vmatpush1.bf16.msra.mxu0 %v181
    %564 = vmatprep.subr.bf16.mxu0 %v186
    %565 = vmatpush1.bf16.msra.mxu0 %v185
    %566 = vmatprep.subr.bf16.mxu0 %v190
    %567 = vmatpush1.bf16.msra.mxu0 %v189
    %568 = vmatprep.subr.bf16.mxu0 %v194
    %569 = vmatpush1.bf16.msra.mxu0 %v193
    %570 = vmatprep.subr.bf16.mxu0 %v198
    %571 = vmatpush1.bf16.msra.mxu0 %v197
    %572 = vmatprep.subr.bf16.mxu0 0
    %573 = vmatpush1.bf16.msra.mxu0 0
    %574 = vmatprep.subr.bf16.mxu0 0
    %575 = vmatpush1.bf16.msra.mxu0 0
    %576 = vmatprep.subr.bf16.mxu0 0
    %577 = vmatpush1.bf16.msra.mxu0 0
    %578 = vmatprep.subr.bf16.mxu0 0
    %579 = vmatpush1.bf16.msra.mxu0 0
    %580 = vmatprep.subr.bf16.mxu0 0
    %581 = vmatpush1.bf16.msra.mxu0 0
    %582 = vmatprep.subr.bf16.mxu0 0
    %583 = vmatpush1.bf16.msra.mxu0 0
    %584 = vmatprep.subr.bf16.mxu0 0
    %585 = vmatpush1.bf16.msra.mxu0 0
    %586 = vmatprep.subr.bf16.mxu0 0
    %587 = vmatpush1.bf16.msra.mxu0 0
    %588 = vmatprep.mubr.bf16.mxu0 0
    %589 = vmatmul.mubr.bf16.gmra.mrb[0].mxu0 %v555
    %v590 = vpop.f32.mrb[0].mxu0
    %v591 = vadd.f32 0.0, %v590
    %v592 = vpop.f32.mrb[0].mxu0
    %v593 = vadd.f32 0.0, %v592
    %v594 = vpop.f32.mrb[0].mxu0
    %v595 = vpop.f32.mrb[0].mxu0
    %596 = vdwg.mxu0
    %597 = vmatprep.subr.bf16.mxu0 %v172
    %598 = vmatpush1.bf16.msra.mxu0 %v171
    %599 = vmatprep.subr.bf16.mxu0 %v176
    %600 = vmatpush1.bf16.msra.mxu0 %v175
    %601 = vmatprep.subr.bf16.mxu0 %v180
    %602 = vmatpush1.bf16.msra.mxu0 %v179
    %603 = vmatprep.subr.bf16.mxu0 %v184
    %604 = vmatpush1.bf16.msra.mxu0 %v183
    %605 = vmatprep.subr.bf16.mxu0 %v188
    %606 = vmatpush1.bf16.msra.mxu0 %v187
    %607 = vmatprep.subr.bf16.mxu0 %v192
    %608 = vmatpush1.bf16.msra.mxu0 %v191
    %609 = vmatprep.subr.bf16.mxu0 %v196
    %610 = vmatpush1.bf16.msra.mxu0 %v195
    %611 = vmatprep.subr.bf16.mxu0 %v200
    %612 = vmatpush1.bf16.msra.mxu0 %v199
    %613 = vmatprep.subr.bf16.mxu0 0
    %614 = vmatpush1.bf16.msra.mxu0 0
    %615 = vmatprep.subr.bf16.mxu0 0
    %616 = vmatpush1.bf16.msra.mxu0 0
    %617 = vmatprep.subr.bf16.mxu0 0
    %618 = vmatpush1.bf16.msra.mxu0 0
    %619 = vmatprep.subr.bf16.mxu0 0
    %620 = vmatpush1.bf16.msra.mxu0 0
    %621 = vmatprep.subr.bf16.mxu0 0
    %622 = vmatpush1.bf16.msra.mxu0 0
    %623 = vmatprep.subr.bf16.mxu0 0
    %624 = vmatpush1.bf16.msra.mxu0 0
    %625 = vmatprep.subr.bf16.mxu0 0
    %626 = vmatpush1.bf16.msra.mxu0 0
    %627 = vmatprep.subr.bf16.mxu0 0
    %628 = vmatpush1.bf16.msra.mxu0 0
    %629 = vmatprep.mubr.bf16.mxu0 0
    %630 = vmatmul.mubr.bf16.gmra.mrb[0].mxu0 %v555
    %v631 = vpop.f32.mrb[0].mxu0
    %v632 = vadd.f32 0.0, %v631
    %v633 = vpop.f32.mrb[0].mxu0
    %v634 = vadd.f32 0.0, %v633
    %v635 = vpop.f32.mrb[0].mxu0
    %v636 = vpop.f32.mrb[0].mxu0
    %637 = vdwg.mxu0
    %v642 = vcombine.low %v591, %v593
    %v643 = vcombine.low %v632, %v634
    %v645 = vunpack.c.l.s4 1983009808
    %v646 = vunpack.c.0.s8 %v645
    %v647 = vlaneseq
    %v648 = vshrl.u32 %v647, 7
    %v649 = vsub.s32 %v646, %v648
    %v650 = vrot.slane %v642, %v649
    %v652 = vunpack.c.l.s4 1983009808
    %v653 = vunpack.c.0.s8 %v652
    %v654 = vlaneseq
    %v655 = vshrl.u32 %v654, 7
    %v656 = vsub.s32 %v653, %v655
    %v657 = vrot.slane %v643, %v656
    %v658 = vcombine.low %v650, %v657
    %v660 = vadd.f32 %v554, %v658
    %v661 = vxor.u32 %v660, 2147483648
    %v662 = vmul.f32 %v661, 1.442695
    %v663 = vpow.pop %v662
    %v664 = vadd.f32 %v663, 1.0
    %v665 = vrcp.pop %v664
    %v666 = vmul.f32 1.0, %v665
    %v668 = vrot.slane %v660, 2
    %v670 = vxor.u32 %v668, 2147483648
    %v671 = vmul.f32 %v670, 1.442695
    %v672 = vpow.pop %v671
    %v673 = vadd.f32 %v672, 1.0
    %v674 = vrcp.pop %v673
    %v675 = vmul.f32 1.0, %v674
    %v676 = vrot.slane %v660, 4
    %v678 = vtanh.pop %v676
    %v679 = vrot.slane %v660, 6
    %v681 = vxor.u32 %v679, 2147483648
    %v682 = vmul.f32 %v681, 1.442695
    %v683 = vpow.pop %v682
    %v684 = vadd.f32 %v683, 1.0
    %v685 = vrcp.pop %v684
    %v686 = vmul.f32 1.0, %v685
    %v687 = vmul.f32 %v675, %v531
    %v688 = vmul.f32 %v666, %v678
    %v689 = vadd.f32 %v687, %v688
    %v690 = vtanh.pop %v689
    %v691 = vmul.f32 %v686, %v690
    %v692 = vmax.f32 %v691, 0.0
    %v693 = vmul.f32 %v692, %v32
    %v694 = vsel %vm371, %v693, 0.0
    %695 = vadd.xlane.f32.xlu0 %v694
    %v696 = vpop.xlane.xlu0 %695
    %v697 = vadd.f32 %v696, %v379
    %v698 = vxor.u32 %v697, 2147483648
    %v699 = vmul.f32 %v698, 1.442695
    %v700 = vpow.pop %v699
    %v701 = vadd.f32 %v700, 1.0
    %v702 = vrcp.pop %v701
    %v703 = vmul.f32 1.0, %v702
    %vm704 = vcmp.eq.s32.totalorder %v36, 2
    %706 = vset.pattern.permute.xlu0 0
    %707 = vperm.xlu0 %706, %v703
    %v708 = vpop.permute.xlu0 %707
    %v710 = vsel %vm704, %v708, %v552
    %s711 = scalar_lea.vmem %s0, 24
    %v712 = vld [vmem:[%s711] sm:$0xff]
    %v713 = vpack.c.bf16 %v691, %v691
    %714 = vmatprep.subr.bf16.mxu0 %v170
    %715 = vmatpush1.bf16.msra.mxu0 %v169
    %716 = vmatprep.subr.bf16.mxu0 %v174
    %717 = vmatpush1.bf16.msra.mxu0 %v173
    %718 = vmatprep.subr.bf16.mxu0 %v178
    %719 = vmatpush1.bf16.msra.mxu0 %v177
    %720 = vmatprep.subr.bf16.mxu0 %v182
    %721 = vmatpush1.bf16.msra.mxu0 %v181
    %722 = vmatprep.subr.bf16.mxu0 %v186
    %723 = vmatpush1.bf16.msra.mxu0 %v185
    %724 = vmatprep.subr.bf16.mxu0 %v190
    %725 = vmatpush1.bf16.msra.mxu0 %v189
    %726 = vmatprep.subr.bf16.mxu0 %v194
    %727 = vmatpush1.bf16.msra.mxu0 %v193
    %728 = vmatprep.subr.bf16.mxu0 %v198
    %729 = vmatpush1.bf16.msra.mxu0 %v197
    %730 = vmatprep.subr.bf16.mxu0 0
    %731 = vmatpush1.bf16.msra.mxu0 0
    %732 = vmatprep.subr.bf16.mxu0 0
    %733 = vmatpush1.bf16.msra.mxu0 0
    %734 = vmatprep.subr.bf16.mxu0 0
    %735 = vmatpush1.bf16.msra.mxu0 0
    %736 = vmatprep.subr.bf16.mxu0 0
    %737 = vmatpush1.bf16.msra.mxu0 0
    %738 = vmatprep.subr.bf16.mxu0 0
    %739 = vmatpush1.bf16.msra.mxu0 0
    %740 = vmatprep.subr.bf16.mxu0 0
    %741 = vmatpush1.bf16.msra.mxu0 0
    %742 = vmatprep.subr.bf16.mxu0 0
    %743 = vmatpush1.bf16.msra.mxu0 0
    %744 = vmatprep.subr.bf16.mxu0 0
    %745 = vmatpush1.bf16.msra.mxu0 0
    %746 = vmatprep.mubr.bf16.mxu0 0
    %747 = vmatmul.mubr.bf16.gmra.mrb[0].mxu0 %v713
    %v748 = vpop.f32.mrb[0].mxu0
    %v749 = vadd.f32 0.0, %v748
    %v750 = vpop.f32.mrb[0].mxu0
    %v751 = vadd.f32 0.0, %v750
    %v752 = vpop.f32.mrb[0].mxu0
    %v753 = vpop.f32.mrb[0].mxu0
    %754 = vdwg.mxu0
    %755 = vmatprep.subr.bf16.mxu0 %v172
    %756 = vmatpush1.bf16.msra.mxu0 %v171
    %757 = vmatprep.subr.bf16.mxu0 %v176
    %758 = vmatpush1.bf16.msra.mxu0 %v175
    %759 = vmatprep.subr.bf16.mxu0 %v180
    %760 = vmatpush1.bf16.msra.mxu0 %v179
    %761 = vmatprep.subr.bf16.mxu0 %v184
    %762 = vmatpush1.bf16.msra.mxu0 %v183
    %763 = vmatprep.subr.bf16.mxu0 %v188
    %764 = vmatpush1.bf16.msra.mxu0 %v187
    %765 = vmatprep.subr.bf16.mxu0 %v192
    %766 = vmatpush1.bf16.msra.mxu0 %v191
    %767 = vmatprep.subr.bf16.mxu0 %v196
    %768 = vmatpush1.bf16.msra.mxu0 %v195
    %769 = vmatprep.subr.bf16.mxu0 %v200
    %770 = vmatpush1.bf16.msra.mxu0 %v199
    %771 = vmatprep.subr.bf16.mxu0 0
    %772 = vmatpush1.bf16.msra.mxu0 0
    %773 = vmatprep.subr.bf16.mxu0 0
    %774 = vmatpush1.bf16.msra.mxu0 0
    %775 = vmatprep.subr.bf16.mxu0 0
    %776 = vmatpush1.bf16.msra.mxu0 0
    %777 = vmatprep.subr.bf16.mxu0 0
    %778 = vmatpush1.bf16.msra.mxu0 0
    %779 = vmatprep.subr.bf16.mxu0 0
    %780 = vmatpush1.bf16.msra.mxu0 0
    %781 = vmatprep.subr.bf16.mxu0 0
    %782 = vmatpush1.bf16.msra.mxu0 0
    %783 = vmatprep.subr.bf16.mxu0 0
    %784 = vmatpush1.bf16.msra.mxu0 0
    %785 = vmatprep.subr.bf16.mxu0 0
    %786 = vmatpush1.bf16.msra.mxu0 0
    %787 = vmatprep.mubr.bf16.mxu0 0
    %788 = vmatmul.mubr.bf16.gmra.mrb[0].mxu0 %v713
    %v789 = vpop.f32.mrb[0].mxu0
    %v790 = vadd.f32 0.0, %v789
    %v791 = vpop.f32.mrb[0].mxu0
    %v792 = vadd.f32 0.0, %v791
    %v793 = vpop.f32.mrb[0].mxu0
    %v794 = vpop.f32.mrb[0].mxu0
    %795 = vdwg.mxu0
    %v800 = vcombine.low %v749, %v751
    %v801 = vcombine.low %v790, %v792
    %v803 = vunpack.c.l.s4 1983009808
    %v804 = vunpack.c.0.s8 %v803
    %v805 = vlaneseq
    %v806 = vshrl.u32 %v805, 7
    %v807 = vsub.s32 %v804, %v806
    %v808 = vrot.slane %v800, %v807
    %v810 = vunpack.c.l.s4 1983009808
    %v811 = vunpack.c.0.s8 %v810
    %v812 = vlaneseq
    %v813 = vshrl.u32 %v812, 7
    %v814 = vsub.s32 %v811, %v813
    %v815 = vrot.slane %v801, %v814
    %v816 = vcombine.low %v808, %v815
    %v818 = vadd.f32 %v712, %v816
    %v819 = vxor.u32 %v818, 2147483648
    %v820 = vmul.f32 %v819, 1.442695
    %v821 = vpow.pop %v820
    %v822 = vadd.f32 %v821, 1.0
    %v823 = vrcp.pop %v822
    %v824 = vmul.f32 1.0, %v823
    %v826 = vrot.slane %v818, 2
    %v828 = vxor.u32 %v826, 2147483648
    %v829 = vmul.f32 %v828, 1.442695
    %v830 = vpow.pop %v829
    %v831 = vadd.f32 %v830, 1.0
    %v832 = vrcp.pop %v831
    %v833 = vmul.f32 1.0, %v832
    %v834 = vrot.slane %v818, 4
    %v836 = vtanh.pop %v834
    %v837 = vrot.slane %v818, 6
    %v839 = vxor.u32 %v837, 2147483648
    %v840 = vmul.f32 %v839, 1.442695
    %v841 = vpow.pop %v840
    %v842 = vadd.f32 %v841, 1.0
    %v843 = vrcp.pop %v842
    %v844 = vmul.f32 1.0, %v843
    %v845 = vmul.f32 %v833, %v689
    %v846 = vmul.f32 %v824, %v836
    %v847 = vadd.f32 %v845, %v846
    %v848 = vtanh.pop %v847
    %v849 = vmul.f32 %v844, %v848
    %v850 = vmax.f32 %v849, 0.0
    %v851 = vmul.f32 %v850, %v32
    %v852 = vsel %vm371, %v851, 0.0
    %853 = vadd.xlane.f32.xlu0 %v852
    %v854 = vpop.xlane.xlu0 %853
    %v855 = vadd.f32 %v854, %v379
    %v856 = vxor.u32 %v855, 2147483648
    %v857 = vmul.f32 %v856, 1.442695
    %v858 = vpow.pop %v857
    %v859 = vadd.f32 %v858, 1.0
    %v860 = vrcp.pop %v859
    %v861 = vmul.f32 1.0, %v860
    %vm862 = vcmp.eq.s32.totalorder %v36, 3
    %864 = vset.pattern.permute.xlu0 0
    %865 = vperm.xlu0 %864, %v861
    %v866 = vpop.permute.xlu0 %865
    %v868 = vsel %vm862, %v866, %v710
    %s869 = scalar_lea.vmem %s0, 32
    %v870 = vld [vmem:[%s869] sm:$0xff]
    %v871 = vpack.c.bf16 %v849, %v849
    %872 = vmatprep.subr.bf16.mxu0 %v170
    %873 = vmatpush1.bf16.msra.mxu0 %v169
    %874 = vmatprep.subr.bf16.mxu0 %v174
    %875 = vmatpush1.bf16.msra.mxu0 %v173
    %876 = vmatprep.subr.bf16.mxu0 %v178
    %877 = vmatpush1.bf16.msra.mxu0 %v177
    %878 = vmatprep.subr.bf16.mxu0 %v182
    %879 = vmatpush1.bf16.msra.mxu0 %v181
    %880 = vmatprep.subr.bf16.mxu0 %v186
    %881 = vmatpush1.bf16.msra.mxu0 %v185
    %882 = vmatprep.subr.bf16.mxu0 %v190
    %883 = vmatpush1.bf16.msra.mxu0 %v189
    %884 = vmatprep.subr.bf16.mxu0 %v194
    %885 = vmatpush1.bf16.msra.mxu0 %v193
    %886 = vmatprep.subr.bf16.mxu0 %v198
    %887 = vmatpush1.bf16.msra.mxu0 %v197
    %888 = vmatprep.subr.bf16.mxu0 0
    %889 = vmatpush1.bf16.msra.mxu0 0
    %890 = vmatprep.subr.bf16.mxu0 0
    %891 = vmatpush1.bf16.msra.mxu0 0
    %892 = vmatprep.subr.bf16.mxu0 0
    %893 = vmatpush1.bf16.msra.mxu0 0
    %894 = vmatprep.subr.bf16.mxu0 0
    %895 = vmatpush1.bf16.msra.mxu0 0
    %896 = vmatprep.subr.bf16.mxu0 0
    %897 = vmatpush1.bf16.msra.mxu0 0
    %898 = vmatprep.subr.bf16.mxu0 0
    %899 = vmatpush1.bf16.msra.mxu0 0
    %900 = vmatprep.subr.bf16.mxu0 0
    %901 = vmatpush1.bf16.msra.mxu0 0
    %902 = vmatprep.subr.bf16.mxu0 0
    %903 = vmatpush1.bf16.msra.mxu0 0
    %904 = vmatprep.mubr.bf16.mxu0 0
    %905 = vmatmul.mubr.bf16.gmra.mrb[0].mxu0 %v871
    %v906 = vpop.f32.mrb[0].mxu0
    %v907 = vadd.f32 0.0, %v906
    %v908 = vpop.f32.mrb[0].mxu0
    %v909 = vadd.f32 0.0, %v908
    %v910 = vpop.f32.mrb[0].mxu0
    %v911 = vpop.f32.mrb[0].mxu0
    %912 = vdwg.mxu0
    %913 = vmatprep.subr.bf16.mxu0 %v172
    %914 = vmatpush1.bf16.msra.mxu0 %v171
    %915 = vmatprep.subr.bf16.mxu0 %v176
    %916 = vmatpush1.bf16.msra.mxu0 %v175
    %917 = vmatprep.subr.bf16.mxu0 %v180
    %918 = vmatpush1.bf16.msra.mxu0 %v179
    %919 = vmatprep.subr.bf16.mxu0 %v184
    %920 = vmatpush1.bf16.msra.mxu0 %v183
    %921 = vmatprep.subr.bf16.mxu0 %v188
    %922 = vmatpush1.bf16.msra.mxu0 %v187
    %923 = vmatprep.subr.bf16.mxu0 %v192
    %924 = vmatpush1.bf16.msra.mxu0 %v191
    %925 = vmatprep.subr.bf16.mxu0 %v196
    %926 = vmatpush1.bf16.msra.mxu0 %v195
    %927 = vmatprep.subr.bf16.mxu0 %v200
    %928 = vmatpush1.bf16.msra.mxu0 %v199
    %929 = vmatprep.subr.bf16.mxu0 0
    %930 = vmatpush1.bf16.msra.mxu0 0
    %931 = vmatprep.subr.bf16.mxu0 0
    %932 = vmatpush1.bf16.msra.mxu0 0
    %933 = vmatprep.subr.bf16.mxu0 0
    %934 = vmatpush1.bf16.msra.mxu0 0
    %935 = vmatprep.subr.bf16.mxu0 0
    %936 = vmatpush1.bf16.msra.mxu0 0
    %937 = vmatprep.subr.bf16.mxu0 0
    %938 = vmatpush1.bf16.msra.mxu0 0
    %939 = vmatprep.subr.bf16.mxu0 0
    %940 = vmatpush1.bf16.msra.mxu0 0
    %941 = vmatprep.subr.bf16.mxu0 0
    %942 = vmatpush1.bf16.msra.mxu0 0
    %943 = vmatprep.subr.bf16.mxu0 0
    %944 = vmatpush1.bf16.msra.mxu0 0
    %945 = vmatprep.mubr.bf16.mxu0 0
    %946 = vmatmul.mubr.bf16.gmra.mrb[0].mxu0 %v871
    %v947 = vpop.f32.mrb[0].mxu0
    %v948 = vadd.f32 0.0, %v947
    %v949 = vpop.f32.mrb[0].mxu0
    %v950 = vadd.f32 0.0, %v949
    %v951 = vpop.f32.mrb[0].mxu0
    %v952 = vpop.f32.mrb[0].mxu0
    %953 = vdwg.mxu0
    %v958 = vcombine.low %v907, %v909
    %v959 = vcombine.low %v948, %v950
    %v961 = vunpack.c.l.s4 1983009808
    %v962 = vunpack.c.0.s8 %v961
    %v963 = vlaneseq
    %v964 = vshrl.u32 %v963, 7
    %v965 = vsub.s32 %v962, %v964
    %v966 = vrot.slane %v958, %v965
    %v968 = vunpack.c.l.s4 1983009808
    %v969 = vunpack.c.0.s8 %v968
    %v970 = vlaneseq
    %v971 = vshrl.u32 %v970, 7
    %v972 = vsub.s32 %v969, %v971
    %v973 = vrot.slane %v959, %v972
    %v974 = vcombine.low %v966, %v973
    %v976 = vadd.f32 %v870, %v974
    %v977 = vxor.u32 %v976, 2147483648
    %v978 = vmul.f32 %v977, 1.442695
    %v979 = vpow.pop %v978
    %v980 = vadd.f32 %v979, 1.0
    %v981 = vrcp.pop %v980
    %v982 = vmul.f32 1.0, %v981
    %v984 = vrot.slane %v976, 2
    %v986 = vxor.u32 %v984, 2147483648
    %v987 = vmul.f32 %v986, 1.442695
    %v988 = vpow.pop %v987
    %v989 = vadd.f32 %v988, 1.0
    %v990 = vrcp.pop %v989
    %v991 = vmul.f32 1.0, %v990
    %v992 = vrot.slane %v976, 4
    %v994 = vtanh.pop %v992
    %v995 = vrot.slane %v976, 6
    %v997 = vxor.u32 %v995, 2147483648
    %v998 = vmul.f32 %v997, 1.442695
    %v999 = vpow.pop %v998
    %v1000 = vadd.f32 %v999, 1.0
    %v1001 = vrcp.pop %v1000
    %v1002 = vmul.f32 1.0, %v1001
    %v1003 = vmul.f32 %v991, %v847
    %v1004 = vmul.f32 %v982, %v994
    %v1005 = vadd.f32 %v1003, %v1004
    %v1006 = vtanh.pop %v1005
    %v1007 = vmul.f32 %v1002, %v1006
    %v1008 = vmax.f32 %v1007, 0.0
    %v1009 = vmul.f32 %v1008, %v32
    %v1010 = vsel %vm371, %v1009, 0.0
    %1011 = vadd.xlane.f32.xlu0 %v1010
    %v1012 = vpop.xlane.xlu0 %1011
    %v1013 = vadd.f32 %v1012, %v379
    %v1014 = vxor.u32 %v1013, 2147483648
    %v1015 = vmul.f32 %v1014, 1.442695
    %v1016 = vpow.pop %v1015
    %v1017 = vadd.f32 %v1016, 1.0
    %v1018 = vrcp.pop %v1017
    %v1019 = vmul.f32 1.0, %v1018
    %vm1020 = vcmp.eq.s32.totalorder %v36, 4
    %1022 = vset.pattern.permute.xlu0 0
    %1023 = vperm.xlu0 %1022, %v1019
    %v1024 = vpop.permute.xlu0 %1023
    %v1026 = vsel %vm1020, %v1024, %v868
    %s1027 = scalar_lea.vmem %s0, 40
    %v1028 = vld [vmem:[%s1027] sm:$0xff]
    %v1029 = vpack.c.bf16 %v1007, %v1007
    %1030 = vmatprep.subr.bf16.mxu0 %v170
    %1031 = vmatpush1.bf16.msra.mxu0 %v169
    %1032 = vmatprep.subr.bf16.mxu0 %v174
    %1033 = vmatpush1.bf16.msra.mxu0 %v173
    %1034 = vmatprep.subr.bf16.mxu0 %v178
    %1035 = vmatpush1.bf16.msra.mxu0 %v177
    %1036 = vmatprep.subr.bf16.mxu0 %v182
    %1037 = vmatpush1.bf16.msra.mxu0 %v181
    %1038 = vmatprep.subr.bf16.mxu0 %v186
    %1039 = vmatpush1.bf16.msra.mxu0 %v185
    %1040 = vmatprep.subr.bf16.mxu0 %v190
    %1041 = vmatpush1.bf16.msra.mxu0 %v189
    %1042 = vmatprep.subr.bf16.mxu0 %v194
    %1043 = vmatpush1.bf16.msra.mxu0 %v193
    %1044 = vmatprep.subr.bf16.mxu0 %v198
    %1045 = vmatpush1.bf16.msra.mxu0 %v197
    %1046 = vmatprep.subr.bf16.mxu0 0
    %1047 = vmatpush1.bf16.msra.mxu0 0
    %1048 = vmatprep.subr.bf16.mxu0 0
    %1049 = vmatpush1.bf16.msra.mxu0 0
    %1050 = vmatprep.subr.bf16.mxu0 0
    %1051 = vmatpush1.bf16.msra.mxu0 0
    %1052 = vmatprep.subr.bf16.mxu0 0
    %1053 = vmatpush1.bf16.msra.mxu0 0
    %1054 = vmatprep.subr.bf16.mxu0 0
    %1055 = vmatpush1.bf16.msra.mxu0 0
    %1056 = vmatprep.subr.bf16.mxu0 0
    %1057 = vmatpush1.bf16.msra.mxu0 0
    %1058 = vmatprep.subr.bf16.mxu0 0
    %1059 = vmatpush1.bf16.msra.mxu0 0
    %1060 = vmatprep.subr.bf16.mxu0 0
    %1061 = vmatpush1.bf16.msra.mxu0 0
    %1062 = vmatprep.mubr.bf16.mxu0 0
    %1063 = vmatmul.mubr.bf16.gmra.mrb[0].mxu0 %v1029
    %v1064 = vpop.f32.mrb[0].mxu0
    %v1065 = vadd.f32 0.0, %v1064
    %v1066 = vpop.f32.mrb[0].mxu0
    %v1067 = vadd.f32 0.0, %v1066
    %v1068 = vpop.f32.mrb[0].mxu0
    %v1069 = vpop.f32.mrb[0].mxu0
    %1070 = vdwg.mxu0
    %1071 = vmatprep.subr.bf16.mxu0 %v172
    %1072 = vmatpush1.bf16.msra.mxu0 %v171
    %1073 = vmatprep.subr.bf16.mxu0 %v176
    %1074 = vmatpush1.bf16.msra.mxu0 %v175
    %1075 = vmatprep.subr.bf16.mxu0 %v180
    %1076 = vmatpush1.bf16.msra.mxu0 %v179
    %1077 = vmatprep.subr.bf16.mxu0 %v184
    %1078 = vmatpush1.bf16.msra.mxu0 %v183
    %1079 = vmatprep.subr.bf16.mxu0 %v188
    %1080 = vmatpush1.bf16.msra.mxu0 %v187
    %1081 = vmatprep.subr.bf16.mxu0 %v192
    %1082 = vmatpush1.bf16.msra.mxu0 %v191
    %1083 = vmatprep.subr.bf16.mxu0 %v196
    %1084 = vmatpush1.bf16.msra.mxu0 %v195
    %1085 = vmatprep.subr.bf16.mxu0 %v200
    %1086 = vmatpush1.bf16.msra.mxu0 %v199
    %1087 = vmatprep.subr.bf16.mxu0 0
    %1088 = vmatpush1.bf16.msra.mxu0 0
    %1089 = vmatprep.subr.bf16.mxu0 0
    %1090 = vmatpush1.bf16.msra.mxu0 0
    %1091 = vmatprep.subr.bf16.mxu0 0
    %1092 = vmatpush1.bf16.msra.mxu0 0
    %1093 = vmatprep.subr.bf16.mxu0 0
    %1094 = vmatpush1.bf16.msra.mxu0 0
    %1095 = vmatprep.subr.bf16.mxu0 0
    %1096 = vmatpush1.bf16.msra.mxu0 0
    %1097 = vmatprep.subr.bf16.mxu0 0
    %1098 = vmatpush1.bf16.msra.mxu0 0
    %1099 = vmatprep.subr.bf16.mxu0 0
    %1100 = vmatpush1.bf16.msra.mxu0 0
    %1101 = vmatprep.subr.bf16.mxu0 0
    %1102 = vmatpush1.bf16.msra.mxu0 0
    %1103 = vmatprep.mubr.bf16.mxu0 0
    %1104 = vmatmul.mubr.bf16.gmra.mrb[0].mxu0 %v1029
    %v1105 = vpop.f32.mrb[0].mxu0
    %v1106 = vadd.f32 0.0, %v1105
    %v1107 = vpop.f32.mrb[0].mxu0
    %v1108 = vadd.f32 0.0, %v1107
    %v1109 = vpop.f32.mrb[0].mxu0
    %v1110 = vpop.f32.mrb[0].mxu0
    %1111 = vdwg.mxu0
    %v1116 = vcombine.low %v1065, %v1067
    %v1117 = vcombine.low %v1106, %v1108
    %v1119 = vunpack.c.l.s4 1983009808
    %v1120 = vunpack.c.0.s8 %v1119
    %v1121 = vlaneseq
    %v1122 = vshrl.u32 %v1121, 7
    %v1123 = vsub.s32 %v1120, %v1122
    %v1124 = vrot.slane %v1116, %v1123
    %v1126 = vunpack.c.l.s4 1983009808
    %v1127 = vunpack.c.0.s8 %v1126
    %v1128 = vlaneseq
    %v1129 = vshrl.u32 %v1128, 7
    %v1130 = vsub.s32 %v1127, %v1129
    %v1131 = vrot.slane %v1117, %v1130
    %v1132 = vcombine.low %v1124, %v1131
    %v1134 = vadd.f32 %v1028, %v1132
    %v1135 = vxor.u32 %v1134, 2147483648
    %v1136 = vmul.f32 %v1135, 1.442695
    %v1137 = vpow.pop %v1136
    %v1138 = vadd.f32 %v1137, 1.0
    %v1139 = vrcp.pop %v1138
    %v1140 = vmul.f32 1.0, %v1139
    %v1142 = vrot.slane %v1134, 2
    %v1144 = vxor.u32 %v1142, 2147483648
    %v1145 = vmul.f32 %v1144, 1.442695
    %v1146 = vpow.pop %v1145
    %v1147 = vadd.f32 %v1146, 1.0
    %v1148 = vrcp.pop %v1147
    %v1149 = vmul.f32 1.0, %v1148
    %v1150 = vrot.slane %v1134, 4
    %v1152 = vtanh.pop %v1150
    %v1153 = vrot.slane %v1134, 6
    %v1155 = vxor.u32 %v1153, 2147483648
    %v1156 = vmul.f32 %v1155, 1.442695
    %v1157 = vpow.pop %v1156
    %v1158 = vadd.f32 %v1157, 1.0
    %v1159 = vrcp.pop %v1158
    %v1160 = vmul.f32 1.0, %v1159
    %v1161 = vmul.f32 %v1149, %v1005
    %v1162 = vmul.f32 %v1140, %v1152
    %v1163 = vadd.f32 %v1161, %v1162
    %v1164 = vtanh.pop %v1163
    %v1165 = vmul.f32 %v1160, %v1164
    %v1166 = vmax.f32 %v1165, 0.0
    %v1167 = vmul.f32 %v1166, %v32
    %v1168 = vsel %vm371, %v1167, 0.0
    %1169 = vadd.xlane.f32.xlu0 %v1168
    %v1170 = vpop.xlane.xlu0 %1169
    %v1171 = vadd.f32 %v1170, %v379
    %v1172 = vxor.u32 %v1171, 2147483648
    %v1173 = vmul.f32 %v1172, 1.442695
    %v1174 = vpow.pop %v1173
    %v1175 = vadd.f32 %v1174, 1.0
    %v1176 = vrcp.pop %v1175
    %v1177 = vmul.f32 1.0, %v1176
    %vm1178 = vcmp.eq.s32.totalorder %v36, 5
    %1180 = vset.pattern.permute.xlu0 0
    %1181 = vperm.xlu0 %1180, %v1177
    %v1182 = vpop.permute.xlu0 %1181
    %v1184 = vsel %vm1178, %v1182, %v1026
    %s1185 = scalar_lea.vmem %s0, 48
    %v1186 = vld [vmem:[%s1185] sm:$0xff]
    %v1187 = vpack.c.bf16 %v1165, %v1165
    %1188 = vmatprep.subr.bf16.mxu0 %v170
    %1189 = vmatpush1.bf16.msra.mxu0 %v169
    %1190 = vmatprep.subr.bf16.mxu0 %v174
    %1191 = vmatpush1.bf16.msra.mxu0 %v173
    %1192 = vmatprep.subr.bf16.mxu0 %v178
    %1193 = vmatpush1.bf16.msra.mxu0 %v177
    %1194 = vmatprep.subr.bf16.mxu0 %v182
    %1195 = vmatpush1.bf16.msra.mxu0 %v181
    %1196 = vmatprep.subr.bf16.mxu0 %v186
    %1197 = vmatpush1.bf16.msra.mxu0 %v185
    %1198 = vmatprep.subr.bf16.mxu0 %v190
    %1199 = vmatpush1.bf16.msra.mxu0 %v189
    %1200 = vmatprep.subr.bf16.mxu0 %v194
    %1201 = vmatpush1.bf16.msra.mxu0 %v193
    %1202 = vmatprep.subr.bf16.mxu0 %v198
    %1203 = vmatpush1.bf16.msra.mxu0 %v197
    %1204 = vmatprep.subr.bf16.mxu0 0
    %1205 = vmatpush1.bf16.msra.mxu0 0
    %1206 = vmatprep.subr.bf16.mxu0 0
    %1207 = vmatpush1.bf16.msra.mxu0 0
    %1208 = vmatprep.subr.bf16.mxu0 0
    %1209 = vmatpush1.bf16.msra.mxu0 0
    %1210 = vmatprep.subr.bf16.mxu0 0
    %1211 = vmatpush1.bf16.msra.mxu0 0
    %1212 = vmatprep.subr.bf16.mxu0 0
    %1213 = vmatpush1.bf16.msra.mxu0 0
    %1214 = vmatprep.subr.bf16.mxu0 0
    %1215 = vmatpush1.bf16.msra.mxu0 0
    %1216 = vmatprep.subr.bf16.mxu0 0
    %1217 = vmatpush1.bf16.msra.mxu0 0
    %1218 = vmatprep.subr.bf16.mxu0 0
    %1219 = vmatpush1.bf16.msra.mxu0 0
    %1220 = vmatprep.mubr.bf16.mxu0 0
    %1221 = vmatmul.mubr.bf16.gmra.mrb[0].mxu0 %v1187
    %v1222 = vpop.f32.mrb[0].mxu0
    %v1223 = vadd.f32 0.0, %v1222
    %v1224 = vpop.f32.mrb[0].mxu0
    %v1225 = vadd.f32 0.0, %v1224
    %v1226 = vpop.f32.mrb[0].mxu0
    %v1227 = vpop.f32.mrb[0].mxu0
    %1228 = vdwg.mxu0
    %1229 = vmatprep.subr.bf16.mxu0 %v172
    %1230 = vmatpush1.bf16.msra.mxu0 %v171
    %1231 = vmatprep.subr.bf16.mxu0 %v176
    %1232 = vmatpush1.bf16.msra.mxu0 %v175
    %1233 = vmatprep.subr.bf16.mxu0 %v180
    %1234 = vmatpush1.bf16.msra.mxu0 %v179
    %1235 = vmatprep.subr.bf16.mxu0 %v184
    %1236 = vmatpush1.bf16.msra.mxu0 %v183
    %1237 = vmatprep.subr.bf16.mxu0 %v188
    %1238 = vmatpush1.bf16.msra.mxu0 %v187
    %1239 = vmatprep.subr.bf16.mxu0 %v192
    %1240 = vmatpush1.bf16.msra.mxu0 %v191
    %1241 = vmatprep.subr.bf16.mxu0 %v196
    %1242 = vmatpush1.bf16.msra.mxu0 %v195
    %1243 = vmatprep.subr.bf16.mxu0 %v200
    %1244 = vmatpush1.bf16.msra.mxu0 %v199
    %1245 = vmatprep.subr.bf16.mxu0 0
    %1246 = vmatpush1.bf16.msra.mxu0 0
    %1247 = vmatprep.subr.bf16.mxu0 0
    %1248 = vmatpush1.bf16.msra.mxu0 0
    %1249 = vmatprep.subr.bf16.mxu0 0
    %1250 = vmatpush1.bf16.msra.mxu0 0
    %1251 = vmatprep.subr.bf16.mxu0 0
    %1252 = vmatpush1.bf16.msra.mxu0 0
    %1253 = vmatprep.subr.bf16.mxu0 0
    %1254 = vmatpush1.bf16.msra.mxu0 0
    %1255 = vmatprep.subr.bf16.mxu0 0
    %1256 = vmatpush1.bf16.msra.mxu0 0
    %1257 = vmatprep.subr.bf16.mxu0 0
    %1258 = vmatpush1.bf16.msra.mxu0 0
    %1259 = vmatprep.subr.bf16.mxu0 0
    %1260 = vmatpush1.bf16.msra.mxu0 0
    %1261 = vmatprep.mubr.bf16.mxu0 0
    %1262 = vmatmul.mubr.bf16.gmra.mrb[0].mxu0 %v1187
    %v1263 = vpop.f32.mrb[0].mxu0
    %v1264 = vadd.f32 0.0, %v1263
    %v1265 = vpop.f32.mrb[0].mxu0
    %v1266 = vadd.f32 0.0, %v1265
    %v1267 = vpop.f32.mrb[0].mxu0
    %v1268 = vpop.f32.mrb[0].mxu0
    %1269 = vdwg.mxu0
    %v1274 = vcombine.low %v1223, %v1225
    %v1275 = vcombine.low %v1264, %v1266
    %v1277 = vunpack.c.l.s4 1983009808
    %v1278 = vunpack.c.0.s8 %v1277
    %v1279 = vlaneseq
    %v1280 = vshrl.u32 %v1279, 7
    %v1281 = vsub.s32 %v1278, %v1280
    %v1282 = vrot.slane %v1274, %v1281
    %v1284 = vunpack.c.l.s4 1983009808
    %v1285 = vunpack.c.0.s8 %v1284
    %v1286 = vlaneseq
    %v1287 = vshrl.u32 %v1286, 7
    %v1288 = vsub.s32 %v1285, %v1287
    %v1289 = vrot.slane %v1275, %v1288
    %v1290 = vcombine.low %v1282, %v1289
    %v1292 = vadd.f32 %v1186, %v1290
    %v1293 = vxor.u32 %v1292, 2147483648
    %v1294 = vmul.f32 %v1293, 1.442695
    %v1295 = vpow.pop %v1294
    %v1296 = vadd.f32 %v1295, 1.0
    %v1297 = vrcp.pop %v1296
    %v1298 = vmul.f32 1.0, %v1297
    %v1300 = vrot.slane %v1292, 2
    %v1302 = vxor.u32 %v1300, 2147483648
    %v1303 = vmul.f32 %v1302, 1.442695
    %v1304 = vpow.pop %v1303
    %v1305 = vadd.f32 %v1304, 1.0
    %v1306 = vrcp.pop %v1305
    %v1307 = vmul.f32 1.0, %v1306
    %v1308 = vrot.slane %v1292, 4
    %v1310 = vtanh.pop %v1308
    %v1311 = vrot.slane %v1292, 6
    %v1313 = vxor.u32 %v1311, 2147483648
    %v1314 = vmul.f32 %v1313, 1.442695
    %v1315 = vpow.pop %v1314
    %v1316 = vadd.f32 %v1315, 1.0
    %v1317 = vrcp.pop %v1316
    %v1318 = vmul.f32 1.0, %v1317
    %v1319 = vmul.f32 %v1307, %v1163
    %v1320 = vmul.f32 %v1298, %v1310
    %v1321 = vadd.f32 %v1319, %v1320
    %v1322 = vtanh.pop %v1321
    %v1323 = vmul.f32 %v1318, %v1322
    %v1324 = vmax.f32 %v1323, 0.0
    %v1325 = vmul.f32 %v1324, %v32
    %v1326 = vsel %vm371, %v1325, 0.0
    %1327 = vadd.xlane.f32.xlu0 %v1326
    %v1328 = vpop.xlane.xlu0 %1327
    %v1329 = vadd.f32 %v1328, %v379
    %v1330 = vxor.u32 %v1329, 2147483648
    %v1331 = vmul.f32 %v1330, 1.442695
    %v1332 = vpow.pop %v1331
    %v1333 = vadd.f32 %v1332, 1.0
    %v1334 = vrcp.pop %v1333
    %v1335 = vmul.f32 1.0, %v1334
    %vm1336 = vcmp.eq.s32.totalorder %v36, 6
    %1338 = vset.pattern.permute.xlu0 0
    %1339 = vperm.xlu0 %1338, %v1335
    %v1340 = vpop.permute.xlu0 %1339
    %v1342 = vsel %vm1336, %v1340, %v1184
    %s1343 = scalar_lea.vmem %s0, 56
    %v1344 = vld [vmem:[%s1343] sm:$0xff]
    %v1345 = vpack.c.bf16 %v1323, %v1323
    %1346 = vmatprep.subr.bf16.mxu0 %v170
    %1347 = vmatpush1.bf16.msra.mxu0 %v169
    %1348 = vmatprep.subr.bf16.mxu0 %v174
    %1349 = vmatpush1.bf16.msra.mxu0 %v173
    %1350 = vmatprep.subr.bf16.mxu0 %v178
    %1351 = vmatpush1.bf16.msra.mxu0 %v177
    %1352 = vmatprep.subr.bf16.mxu0 %v182
    %1353 = vmatpush1.bf16.msra.mxu0 %v181
    %1354 = vmatprep.subr.bf16.mxu0 %v186
    %1355 = vmatpush1.bf16.msra.mxu0 %v185
    %1356 = vmatprep.subr.bf16.mxu0 %v190
    %1357 = vmatpush1.bf16.msra.mxu0 %v189
    %1358 = vmatprep.subr.bf16.mxu0 %v194
    %1359 = vmatpush1.bf16.msra.mxu0 %v193
    %1360 = vmatprep.subr.bf16.mxu0 %v198
    %1361 = vmatpush1.bf16.msra.mxu0 %v197
    %1362 = vmatprep.subr.bf16.mxu0 0
    %1363 = vmatpush1.bf16.msra.mxu0 0
    %1364 = vmatprep.subr.bf16.mxu0 0
    %1365 = vmatpush1.bf16.msra.mxu0 0
    %1366 = vmatprep.subr.bf16.mxu0 0
    %1367 = vmatpush1.bf16.msra.mxu0 0
    %1368 = vmatprep.subr.bf16.mxu0 0
    %1369 = vmatpush1.bf16.msra.mxu0 0
    %1370 = vmatprep.subr.bf16.mxu0 0
    %1371 = vmatpush1.bf16.msra.mxu0 0
    %1372 = vmatprep.subr.bf16.mxu0 0
    %1373 = vmatpush1.bf16.msra.mxu0 0
    %1374 = vmatprep.subr.bf16.mxu0 0
    %1375 = vmatpush1.bf16.msra.mxu0 0
    %1376 = vmatprep.subr.bf16.mxu0 0
    %1377 = vmatpush1.bf16.msra.mxu0 0
    %1378 = vmatprep.mubr.bf16.mxu0 0
    %1379 = vmatmul.mubr.bf16.gmra.mrb[0].mxu0 %v1345
    %v1380 = vpop.f32.mrb[0].mxu0
    %v1381 = vadd.f32 0.0, %v1380
    %v1382 = vpop.f32.mrb[0].mxu0
    %v1383 = vadd.f32 0.0, %v1382
    %v1384 = vpop.f32.mrb[0].mxu0
    %v1385 = vpop.f32.mrb[0].mxu0
    %1386 = vdwg.mxu0
    %1387 = vmatprep.subr.bf16.mxu0 %v172
    %1388 = vmatpush1.bf16.msra.mxu0 %v171
    %1389 = vmatprep.subr.bf16.mxu0 %v176
    %1390 = vmatpush1.bf16.msra.mxu0 %v175
    %1391 = vmatprep.subr.bf16.mxu0 %v180
    %1392 = vmatpush1.bf16.msra.mxu0 %v179
    %1393 = vmatprep.subr.bf16.mxu0 %v184
    %1394 = vmatpush1.bf16.msra.mxu0 %v183
    %1395 = vmatprep.subr.bf16.mxu0 %v188
    %1396 = vmatpush1.bf16.msra.mxu0 %v187
    %1397 = vmatprep.subr.bf16.mxu0 %v192
    %1398 = vmatpush1.bf16.msra.mxu0 %v191
    %1399 = vmatprep.subr.bf16.mxu0 %v196
    %1400 = vmatpush1.bf16.msra.mxu0 %v195
    %1401 = vmatprep.subr.bf16.mxu0 %v200
    %1402 = vmatpush1.bf16.msra.mxu0 %v199
    %1403 = vmatprep.subr.bf16.mxu0 0
    %1404 = vmatpush1.bf16.msra.mxu0 0
    %1405 = vmatprep.subr.bf16.mxu0 0
    %1406 = vmatpush1.bf16.msra.mxu0 0
    %1407 = vmatprep.subr.bf16.mxu0 0
    %1408 = vmatpush1.bf16.msra.mxu0 0
    %1409 = vmatprep.subr.bf16.mxu0 0
    %1410 = vmatpush1.bf16.msra.mxu0 0
    %1411 = vmatprep.subr.bf16.mxu0 0
    %1412 = vmatpush1.bf16.msra.mxu0 0
    %1413 = vmatprep.subr.bf16.mxu0 0
    %1414 = vmatpush1.bf16.msra.mxu0 0
    %1415 = vmatprep.subr.bf16.mxu0 0
    %1416 = vmatpush1.bf16.msra.mxu0 0
    %1417 = vmatprep.subr.bf16.mxu0 0
    %1418 = vmatpush1.bf16.msra.mxu0 0
    %1419 = vmatprep.mubr.bf16.mxu0 0
    %1420 = vmatmul.mubr.bf16.gmra.mrb[0].mxu0 %v1345
    %v1421 = vpop.f32.mrb[0].mxu0
    %v1422 = vadd.f32 0.0, %v1421
    %v1423 = vpop.f32.mrb[0].mxu0
    %v1424 = vadd.f32 0.0, %v1423
    %v1425 = vpop.f32.mrb[0].mxu0
    %v1426 = vpop.f32.mrb[0].mxu0
    %1427 = vdwg.mxu0
    %v1432 = vcombine.low %v1381, %v1383
    %v1433 = vcombine.low %v1422, %v1424
    %v1435 = vunpack.c.l.s4 1983009808
    %v1436 = vunpack.c.0.s8 %v1435
    %v1437 = vlaneseq
    %v1438 = vshrl.u32 %v1437, 7
    %v1439 = vsub.s32 %v1436, %v1438
    %v1440 = vrot.slane %v1432, %v1439
    %v1442 = vunpack.c.l.s4 1983009808
    %v1443 = vunpack.c.0.s8 %v1442
    %v1444 = vlaneseq
    %v1445 = vshrl.u32 %v1444, 7
    %v1446 = vsub.s32 %v1443, %v1445
    %v1447 = vrot.slane %v1433, %v1446
    %v1448 = vcombine.low %v1440, %v1447
    %v1450 = vadd.f32 %v1344, %v1448
    %v1451 = vxor.u32 %v1450, 2147483648
    %v1452 = vmul.f32 %v1451, 1.442695
    %v1453 = vpow.pop %v1452
    %v1454 = vadd.f32 %v1453, 1.0
    %v1455 = vrcp.pop %v1454
    %v1456 = vmul.f32 1.0, %v1455
    %v1458 = vrot.slane %v1450, 2
    %v1460 = vxor.u32 %v1458, 2147483648
    %v1461 = vmul.f32 %v1460, 1.442695
    %v1462 = vpow.pop %v1461
    %v1463 = vadd.f32 %v1462, 1.0
    %v1464 = vrcp.pop %v1463
    %v1465 = vmul.f32 1.0, %v1464
    %v1466 = vrot.slane %v1450, 4
    %v1468 = vtanh.pop %v1466
    %v1469 = vrot.slane %v1450, 6
    %v1471 = vxor.u32 %v1469, 2147483648
    %v1472 = vmul.f32 %v1471, 1.442695
    %v1473 = vpow.pop %v1472
    %v1474 = vadd.f32 %v1473, 1.0
    %v1475 = vrcp.pop %v1474
    %v1476 = vmul.f32 1.0, %v1475
    %v1477 = vmul.f32 %v1465, %v1321
    %v1478 = vmul.f32 %v1456, %v1468
    %v1479 = vadd.f32 %v1477, %v1478
    %v1480 = vtanh.pop %v1479
    %v1481 = vmul.f32 %v1476, %v1480
    %v1482 = vmax.f32 %v1481, 0.0
    %v1483 = vmul.f32 %v1482, %v32
    %v1484 = vsel %vm371, %v1483, 0.0
    %1485 = vadd.xlane.f32.xlu0 %v1484
    %v1486 = vpop.xlane.xlu0 %1485
    %v1487 = vadd.f32 %v1486, %v379
    %v1488 = vxor.u32 %v1487, 2147483648
    %v1489 = vmul.f32 %v1488, 1.442695
    %v1490 = vpow.pop %v1489
    %v1491 = vadd.f32 %v1490, 1.0
    %v1492 = vrcp.pop %v1491
    %v1493 = vmul.f32 1.0, %v1492
    %vm1494 = vcmp.eq.s32.totalorder %v36, 7
    %1496 = vset.pattern.permute.xlu0 0
    %1497 = vperm.xlu0 %1496, %v1493
    %v1498 = vpop.permute.xlu0 %1497
    %v1500 = vsel %vm1494, %v1498, %v1342
    %1501 = vst [vmem:[#allocation2] sm:$0x3] %v1481
    %1502 = vst [vmem:[#allocation3] sm:$0x3] %v1479
    %vm1503 = vcmask 58368
    %1504 = vst.msk [vmem:[#allocation5] sm:$0x3] %vm1503, %v1500
    // Predicated region
    $region22: #{lstm_predict_padded.3} parent=1 // pred_check
      _
    $region23: #{lstm_predict_padded.3} parent=1 // pred_check_branch
      %1506 = sbr.rel (0) target = $region25
    $region24: #{lstm_predict_padded.3} parent=1 // pred_region
      %s1508 = ssub.s32 32, 32
      %1509 = vsyncadd [#allocation6], %s1508
      %s1511 = sshll.u32 [#allocation5], 4
      %s1512 = int_to_ptr.vmem [resolvable:$true] %s1511
      %1514 = dma.vmem_to_hbm [thread:$0]  %s1512, 32, %s4, [#allocation6]
    $region25: #{lstm_predict_padded.3} parent=1 // pred_fallthru
      _
    // Predicated region
    $region26: #{lstm_predict_padded.3} parent=1 // pred_check
      _
    $region27: #{lstm_predict_padded.3} parent=1 // pred_check_branch
      %1516 = sbr.rel (0) target = $region29
    $region28: #{lstm_predict_padded.3} parent=1 // pred_region
      %1517 = dma.done [#allocation6], 32
    $region29: #{lstm_predict_padded.3} parent=1 // pred_fallthru
      _
    %1518 = vsyncpa [#allocation6], 1

</llo_original>
